<compile_context>
chip_gen: v7x
topology: tpu7x:2x2x1
jax: 0.10.0
libtpu: 0.0.40
codegen_flags: <defaults>
</compile_context>

<pallas_src>
import jax
import jax.numpy as jnp
import numpy as np
from jax.experimental import pallas as pl
from jax.experimental.pallas import tpu as pltpu


def mvf_kernel(f_ref, vp_ref, w1a_ref, w1v_ref, b1_ref, w2_ref, b2_ref,
               feat_ref, p_ref):
    """One grid step = one batch element x one tile of TN points, all V views.

    f_ref:   (V, TN, C)  caller dtype (cast in-kernel to the weight dtype)
    vp_ref:  (TN, V)     f32 packed visibility (views on the lane axis)
    w1a_ref: (C, H)      compute dtype    w1v_ref/b1_ref: (1, H) f32
    w2_ref:  (H, C+1)    compute dtype    b2_ref: (1, C+1) f32
    feat_ref: (TN, C) f32                 p_ref: (TN, V) f32
    """
    V, TN, C = f_ref.shape
    M = V * TN
    cdt = w1a_ref.dtype

    # Hoisted weight loads (used across the per-view loops below).
    w1a = w1a_ref[...]
    w1v = w1v_ref[...]                     # (1, H) f32 visibility row
    b1 = b1_ref[...]
    w2 = w2_ref[...]
    b2 = b2_ref[...]
    vp = vp_ref[...]                       # (TN, V) f32

    # ---- layer 1 over all V*TN points: one MXU matmul, K = C (aligned) ------
    f_c = f_ref[...].astype(cdt).reshape(M, C)   # leading-dim collapse (TN%8==0)
    z = jnp.dot(f_c, w1a, preferred_element_type=jnp.float32)        # (M, H)

    # ---- per view: rank-1 visibility update + ReLU + layer 2 ----------------
    # vp[:, vi:vi+1] is view vi's (TN, 1) visibility column "for free" (static
    # lane slice of the packed block), so the first Linear's extra input column
    # never needs an HBM concat nor an in-kernel relayout; K stays 32-aligned.
    xs = []
    for vi in range(V):
        z_v = z[vi * TN:(vi + 1) * TN] + vp[:, vi:vi + 1] * w1v + b1  # f32
        hid_v = jnp.maximum(z_v, 0.0).astype(cdt)                    # (TN, H)
        xs.append(jnp.dot(hid_v, w2,
                          preferred_element_type=jnp.float32) + b2)  # (TN, C+1)

    # ---- clamped softmax over views + weighted sum (f32 epilogue) -----------
    vw = [jnp.clip(vp[:, vi:vi + 1] * xs[vi][:, C:C + 1], 0.0, 1.0)
          for vi in range(V)]
    m = vw[0]
    for vi in range(1, V):
        m = jnp.maximum(m, vw[vi])
    e = [jnp.exp(t - m) for t in vw]
    s = e[0]
    for vi in range(1, V):
        s = s + e[vi]
    inv_s = 1.0 / s                                                   # (TN, 1)

    acc = None
    for vi in range(V):
        p_v = e[vi] * inv_s                                           # (TN, 1)
        p_ref[:, vi:vi + 1] = p_v.astype(p_ref.dtype)                 # packed p
        h_v = xs[vi][:, :C]                                           # (TN, C)
        acc = h_v * p_v if acc is None else acc + h_v * p_v
    feat_ref[...] = acc.astype(feat_ref.dtype)


def _ceil_div(a, b):
    return -(-a // b)


def _round_up(x, m):
    return _ceil_div(x, m) * m


def _pick_tile(N, B, target):
    """Point-tile along N: minimal padding, and >= 2 grid steps for megacore."""
    k = max(1, _ceil_div(N, max(8, target)))
    if B * k < 2 and N >= 16:
        k = 2            # v7x has 2 TensorCores; don't leave one idle
    tile = max(8, _round_up(_ceil_div(N, k), 8))
    return tile, tile * k


def _vmem_limit_bytes(tile, V, C, H, f_itemsize):
    """Scoped-VMEM request derived from the tile footprint (with headroom)."""
    lane = 128
    blocks = 2 * (V * tile * lane * f_itemsize    # f block (lane-padded C)
                  + tile * lane * 4               # packed v block
                  + tile * lane * 4               # feat out block
                  + tile * lane * 4)              # packed p out block
    interm = 4 * V * tile * H * 4                 # z / hid / x f32 transients
    est = blocks + interm + (2 << 20)
    return int(min(48 << 20, max(32 << 20, est)))


def mvf_forward(f, v, params, *, in_ch=32, tn=None, compute_dtype=jnp.bfloat16):
    """f: (B, V, N, C), v: (B, V, N, 1) -> (feat (B, N, C) f32, p (B, V, N, 1) f32).

    compute_dtype feeds the MXU (bf16 by default; accumulation, visibility,
    softmax and the weighted sum stay f32).  Pass jnp.float32 for exact f32.
    `tn` is a target tile size along N (default ~1024 points per step).
    """
    B, V, N, C = f.shape
    assert C == in_ch
    assert v.shape == (B, V, N, 1)
    w1, b1, w2, b2 = params
    H = w1.shape[1]
    C1 = C + 1
    assert w1.shape == (C1, H) and w2.shape == (H, C1)

    # Packed visibility (B, N, V): views on the lane axis.  Tiny tensor; gives
    # the kernel per-view (TN, 1) columns via static lane slices and a VMEM
    # block that is 128/V-padded instead of 128x for a (..., 1) block.
    vp = jnp.transpose(v[..., 0].astype(jnp.float32), (0, 2, 1))

    target = tn if tn is not None else 1024
    tile, Np = _pick_tile(N, B, target)
    if Np != N:
        # Small tail pad only (a handful of rows); padded rows are row-local
        # garbage and sliced off below.
        f = jnp.pad(f, ((0, 0), (0, 0), (0, Np - N), (0, 0)))
        vp = jnp.pad(vp, ((0, 0), (0, Np - N), (0, 0)))

    # Weights: matmul operands in the compute dtype; the visibility row, biases
    # and the whole softmax path stay f32.
    w1a = w1[:C].astype(compute_dtype)            # (C, H)
    w1v = w1[C:C + 1].astype(jnp.float32)         # (1, H)
    w2c = w2.astype(compute_dtype)                # (H, C+1)
    b1r = b1.reshape(1, H).astype(jnp.float32)
    b2r = b2.reshape(1, C1).astype(jnp.float32)

    feat_out, p_out = pl.pallas_call(
        mvf_kernel,
        out_shape=(jax.ShapeDtypeStruct((B, Np, C), jnp.float32),
                   jax.ShapeDtypeStruct((B, Np, V), jnp.float32)),
        grid_spec=pltpu.PrefetchScalarGridSpec(
            num_scalar_prefetch=0,
            grid=(B, Np // tile),
            in_specs=[
                pl.BlockSpec((None, V, tile, C), lambda b, j: (b, 0, j, 0)),
                pl.BlockSpec((None, tile, V), lambda b, j: (b, j, 0)),
                pl.BlockSpec((C, H), lambda b, j: (0, 0)),
                pl.BlockSpec((1, H), lambda b, j: (0, 0)),
                pl.BlockSpec((1, H), lambda b, j: (0, 0)),
                pl.BlockSpec((H, C1), lambda b, j: (0, 0)),
                pl.BlockSpec((1, C1), lambda b, j: (0, 0)),
            ],
            out_specs=(
                pl.BlockSpec((None, tile, C), lambda b, j: (b, j, 0)),
                pl.BlockSpec((None, tile, V), lambda b, j: (b, j, 0)),
            ),
        ),
        compiler_params=pltpu.CompilerParams(
            dimension_semantics=("parallel", "parallel"),
            vmem_limit_bytes=_vmem_limit_bytes(tile, V, C, H,
                                               f.dtype.itemsize)),
    )(f, vp, w1a, w1v, b1r, w2c, b2r)

    feat = feat_out[:, :N, :]
    p = jnp.transpose(p_out[:, :N, :], (0, 2, 1))[..., None]   # (B, V, N, 1)
    return feat, p


def init_params(key, in_ch=32, hidden_dim=128):
    """kaiming_normal_ (fan_in, gain=sqrt(2)) weights, zero biases.

    Stored transposed for right-multiplication: w1 (C+1,H), w2 (H,C+1).
    """
    C1 = in_ch + 1
    k1, k2 = jax.random.split(key)
    std1 = float(np.sqrt(2.0 / C1))
    std2 = float(np.sqrt(2.0 / hidden_dim))
    w1 = std1 * jax.random.normal(k1, (C1, hidden_dim), dtype=jnp.float32)
    b1 = jnp.zeros((hidden_dim,), dtype=jnp.float32)
    w2 = std2 * jax.random.normal(k2, (hidden_dim, C1), dtype=jnp.float32)
    b2 = jnp.zeros((C1,), dtype=jnp.float32)
    return (w1, b1, w2, b2)


def mvf_reference(f, v, params, in_ch=32):
    """Pure-JAX reference mirroring the PyTorch forward."""
    w1, b1, w2, b2 = params
    feat = jnp.concatenate([f, v], axis=-1)
    x = jnp.maximum(feat @ w1 + b1, 0.0) @ w2 + b2
    h = x[..., :in_ch]
    w = x[..., -1:]
    vv = jnp.clip(v * w, 0.0, 1.0)
    p = jax.nn.softmax(vv, axis=1)
    return jnp.sum(h * p, axis=1), p


if __name__ == "__main__":
    B, V, N, C, H = 2, 4, 16, 32, 128
    key = jax.random.PRNGKey(0)
    kf, kv, kp, kf2, kv2 = jax.random.split(key, 5)
    f = jax.random.normal(kf, (B, V, N, C), dtype=jnp.float32)
    v = jax.random.normal(kv, (B, V, N, 1), dtype=jnp.float32)
    params = init_params(kp, in_ch=C, hidden_dim=H)

    # --- exact f32 compute path, single tile per batch -----------------------
    feat_f32, p_f32 = mvf_forward(f, v, params, in_ch=C,
                                  compute_dtype=jnp.float32)
    jax.block_until_ready((feat_f32, p_f32))
    ref_feat, ref_p = mvf_reference(f, v, params, in_ch=C)
    np.testing.assert_allclose(np.asarray(feat_f32), np.asarray(ref_feat),
                               rtol=1e-4, atol=1e-4)
    np.testing.assert_allclose(np.asarray(p_f32), np.asarray(ref_p),
                               rtol=1e-4, atol=1e-4)

    # --- f32 path, multi-tile grid with non-divisible N (adaptive tile) ------
    N2 = 200
    f2 = jax.random.normal(kf2, (B, V, N2, C), dtype=jnp.float32)
    v2 = jax.random.normal(kv2, (B, V, N2, 1), dtype=jnp.float32)
    feat2, p2 = mvf_forward(f2, v2, params, in_ch=C, tn=128,
                            compute_dtype=jnp.float32)
    jax.block_until_ready((feat2, p2))
    ref_feat2, ref_p2 = mvf_reference(f2, v2, params, in_ch=C)
    np.testing.assert_allclose(np.asarray(feat2), np.asarray(ref_feat2),
                               rtol=1e-4, atol=1e-4)
    np.testing.assert_allclose(np.asarray(p2), np.asarray(ref_p2),
                               rtol=1e-4, atol=1e-4)

    # --- default bf16 compute path (MXU-native): compare against a reference
    #     evaluated on bf16-rounded operands so only accumulation effects remain.
    feat_bf, p_bf = mvf_forward(f, v, params, in_ch=C)
    jax.block_until_ready((feat_bf, p_bf))
    w1, b1, w2, b2 = params
    w1_r = jnp.concatenate(
        [w1[:C].astype(jnp.bfloat16).astype(jnp.float32), w1[C:]], axis=0)
    params_r = (w1_r, b1, w2.astype(jnp.bfloat16).astype(jnp.float32), b2)
    f_r = f.astype(jnp.bfloat16).astype(jnp.float32)
    ref_feat_bf, ref_p_bf = mvf_reference(f_r, v, params_r, in_ch=C)
    np.testing.assert_allclose(np.asarray(feat_bf), np.asarray(ref_feat_bf),
                               rtol=5e-2, atol=5e-2)
    np.testing.assert_allclose(np.asarray(p_bf), np.asarray(ref_p_bf),
                               rtol=5e-2, atol=5e-2)

    print("KERNEL_OK")
</pallas_src>

<mosaic_0001>
module attributes {stable_mosaic.version = 11 : i64} {
  func.func @mvf_kernel(%arg0: i32, %arg1: i32, %arg2: memref<1x4x16x32xf32, #tpu.memory_space<vmem>>, %arg3: memref<1x16x4xf32, #tpu.memory_space<vmem>>, %arg4: memref<32x128xf32, #tpu.memory_space<vmem>>, %arg5: memref<1x128xf32, #tpu.memory_space<vmem>>, %arg6: memref<1x128xf32, #tpu.memory_space<vmem>>, %arg7: memref<128x33xf32, #tpu.memory_space<vmem>>, %arg8: memref<1x33xf32, #tpu.memory_space<vmem>>, %arg9: memref<1x16x32xf32, #tpu.memory_space<vmem>>, %arg10: memref<1x16x4xf32, #tpu.memory_space<vmem>>) attributes {dimension_semantics = [#tpu.dimension_semantics<parallel>, #tpu.dimension_semantics<parallel>], iteration_bounds = array<i64: 2, 1>, scalar_prefetch = 0 : i64, scratch_operands = 0 : i64, tpu.core_type = #tpu.core_type<tc>, window_params = [{transform_indices = @transform_0, window_bounds = array<i64: 1, 4, 16, 32>}, {transform_indices = @transform_1, window_bounds = array<i64: 1, 16, 4>}, {pipeline_mode = #tpu.pipeline_mode<synchronous>, transform_indices = @transform_2, window_bounds = array<i64: 32, 128>}, {pipeline_mode = #tpu.pipeline_mode<synchronous>, transform_indices = @transform_3, window_bounds = array<i64: 1, 128>}, {pipeline_mode = #tpu.pipeline_mode<synchronous>, transform_indices = @transform_4, window_bounds = array<i64: 1, 128>}, {pipeline_mode = #tpu.pipeline_mode<synchronous>, transform_indices = @transform_5, window_bounds = array<i64: 128, 33>}, {pipeline_mode = #tpu.pipeline_mode<synchronous>, transform_indices = @transform_6, window_bounds = array<i64: 1, 33>}, {transform_indices = @transform_7, window_bounds = array<i64: 1, 16, 32>}, {transform_indices = @transform_8, window_bounds = array<i64: 1, 16, 4>}]} {
    %c0 = arith.constant 0 : index
    %c0_0 = arith.constant 0 : index
    %0 = vector.load %arg4[%c0, %c0_0] : memref<32x128xf32, #tpu.memory_space<vmem>>, vector<32x128xf32>
    %c0_1 = arith.constant 0 : index
    %c0_2 = arith.constant 0 : index
    %1 = vector.load %arg5[%c0_1, %c0_2] : memref<1x128xf32, #tpu.memory_space<vmem>>, vector<1x128xf32>
    %c0_3 = arith.constant 0 : index
    %c0_4 = arith.constant 0 : index
    %2 = vector.load %arg6[%c0_3, %c0_4] : memref<1x128xf32, #tpu.memory_space<vmem>>, vector<1x128xf32>
    %c0_5 = arith.constant 0 : index
    %c0_6 = arith.constant 0 : index
    %3 = vector.load %arg7[%c0_5, %c0_6] : memref<128x33xf32, #tpu.memory_space<vmem>>, vector<128x33xf32>
    %c0_7 = arith.constant 0 : index
    %c0_8 = arith.constant 0 : index
    %4 = vector.load %arg8[%c0_7, %c0_8] : memref<1x33xf32, #tpu.memory_space<vmem>>, vector<1x33xf32>
    %c0_9 = arith.constant 0 : index
    %c0_10 = arith.constant 0 : index
    %c0_11 = arith.constant 0 : index
    %5 = vector.load %arg3[%c0_9, %c0_10, %c0_11] : memref<1x16x4xf32, #tpu.memory_space<vmem>>, vector<1x16x4xf32>
    %6 = vector.shape_cast %5 : vector<1x16x4xf32> to vector<16x4xf32>
    %c0_12 = arith.constant 0 : index
    %c0_13 = arith.constant 0 : index
    %c0_14 = arith.constant 0 : index
    %c0_15 = arith.constant 0 : index
    %7 = vector.load %arg2[%c0_12, %c0_13, %c0_14, %c0_15] : memref<1x4x16x32xf32, #tpu.memory_space<vmem>>, vector<1x4x16x32xf32>
    %8 = vector.shape_cast %7 : vector<1x4x16x32xf32> to vector<4x16x32xf32>
    %9 = vector.shape_cast %8 : vector<4x16x32xf32> to vector<64x32xf32>
    %cst = arith.constant dense<0.000000e+00> : vector<64x128xf32>
    %10 = tpu.matmul %9, %0, %cst {dimension_numbers = #tpu.dot_dimension_numbers<[1], [0], [0], [1], [0, 0, 1, 1], [], []>} : vector<64x32xf32>, vector<32x128xf32>, vector<64x128xf32> -> vector<64x128xf32>
    %11 = vector.extract_strided_slice %10 {offsets = [0, 0], sizes = [16, 128], strides = [1, 1]} : vector<64x128xf32> to vector<16x128xf32>
    %12 = vector.extract_strided_slice %6 {offsets = [0, 0], sizes = [16, 1], strides = [1, 1]} : vector<16x4xf32> to vector<16x1xf32>
    %13 = vector.broadcast %12 : vector<16x1xf32> to vector<16x128xf32>
    %14 = vector.broadcast %1 : vector<1x128xf32> to vector<16x128xf32>
    %15 = arith.mulf %13, %14 : vector<16x128xf32>
    %16 = arith.addf %11, %15 : vector<16x128xf32>
    %17 = vector.broadcast %2 : vector<1x128xf32> to vector<16x128xf32>
    %18 = arith.addf %16, %17 : vector<16x128xf32>
    %cst_16 = arith.constant 0.000000e+00 : f32
    %19 = vector.broadcast %cst_16 : f32 to vector<16x128xf32>
    %20 = arith.maximumf %18, %19 : vector<16x128xf32>
    %cst_17 = arith.constant dense<0.000000e+00> : vector<16x33xf32>
    %21 = tpu.matmul %20, %3, %cst_17 {dimension_numbers = #tpu.dot_dimension_numbers<[1], [0], [0], [1], [0, 0, 1, 1], [], []>} : vector<16x128xf32>, vector<128x33xf32>, vector<16x33xf32> -> vector<16x33xf32>
    %22 = vector.broadcast %4 : vector<1x33xf32> to vector<16x33xf32>
    %23 = arith.addf %21, %22 : vector<16x33xf32>
    %24 = vector.extract_strided_slice %10 {offsets = [16, 0], sizes = [16, 128], strides = [1, 1]} : vector<64x128xf32> to vector<16x128xf32>
    %25 = vector.extract_strided_slice %6 {offsets = [0, 1], sizes = [16, 1], strides = [1, 1]} : vector<16x4xf32> to vector<16x1xf32>
    %26 = vector.broadcast %25 : vector<16x1xf32> to vector<16x128xf32>
    %27 = vector.broadcast %1 : vector<1x128xf32> to vector<16x128xf32>
    %28 = arith.mulf %26, %27 : vector<16x128xf32>
    %29 = arith.addf %24, %28 : vector<16x128xf32>
    %30 = vector.broadcast %2 : vector<1x128xf32> to vector<16x128xf32>
    %31 = arith.addf %29, %30 : vector<16x128xf32>
    %cst_18 = arith.constant 0.000000e+00 : f32
    %32 = vector.broadcast %cst_18 : f32 to vector<16x128xf32>
    %33 = arith.maximumf %31, %32 : vector<16x128xf32>
    %cst_19 = arith.constant dense<0.000000e+00> : vector<16x33xf32>
    %34 = tpu.matmul %33, %3, %cst_19 {dimension_numbers = #tpu.dot_dimension_numbers<[1], [0], [0], [1], [0, 0, 1, 1], [], []>} : vector<16x128xf32>, vector<128x33xf32>, vector<16x33xf32> -> vector<16x33xf32>
    %35 = vector.broadcast %4 : vector<1x33xf32> to vector<16x33xf32>
    %36 = arith.addf %34, %35 : vector<16x33xf32>
    %37 = vector.extract_strided_slice %10 {offsets = [32, 0], sizes = [16, 128], strides = [1, 1]} : vector<64x128xf32> to vector<16x128xf32>
    %38 = vector.extract_strided_slice %6 {offsets = [0, 2], sizes = [16, 1], strides = [1, 1]} : vector<16x4xf32> to vector<16x1xf32>
    %39 = vector.broadcast %38 : vector<16x1xf32> to vector<16x128xf32>
    %40 = vector.broadcast %1 : vector<1x128xf32> to vector<16x128xf32>
    %41 = arith.mulf %39, %40 : vector<16x128xf32>
    %42 = arith.addf %37, %41 : vector<16x128xf32>
    %43 = vector.broadcast %2 : vector<1x128xf32> to vector<16x128xf32>
    %44 = arith.addf %42, %43 : vector<16x128xf32>
    %cst_20 = arith.constant 0.000000e+00 : f32
    %45 = vector.broadcast %cst_20 : f32 to vector<16x128xf32>
    %46 = arith.maximumf %44, %45 : vector<16x128xf32>
    %cst_21 = arith.constant dense<0.000000e+00> : vector<16x33xf32>
    %47 = tpu.matmul %46, %3, %cst_21 {dimension_numbers = #tpu.dot_dimension_numbers<[1], [0], [0], [1], [0, 0, 1, 1], [], []>} : vector<16x128xf32>, vector<128x33xf32>, vector<16x33xf32> -> vector<16x33xf32>
    %48 = vector.broadcast %4 : vector<1x33xf32> to vector<16x33xf32>
    %49 = arith.addf %47, %48 : vector<16x33xf32>
    %50 = vector.extract_strided_slice %10 {offsets = [48, 0], sizes = [16, 128], strides = [1, 1]} : vector<64x128xf32> to vector<16x128xf32>
    %51 = vector.extract_strided_slice %6 {offsets = [0, 3], sizes = [16, 1], strides = [1, 1]} : vector<16x4xf32> to vector<16x1xf32>
    %52 = vector.broadcast %51 : vector<16x1xf32> to vector<16x128xf32>
    %53 = vector.broadcast %1 : vector<1x128xf32> to vector<16x128xf32>
    %54 = arith.mulf %52, %53 : vector<16x128xf32>
    %55 = arith.addf %50, %54 : vector<16x128xf32>
    %56 = vector.broadcast %2 : vector<1x128xf32> to vector<16x128xf32>
    %57 = arith.addf %55, %56 : vector<16x128xf32>
    %cst_22 = arith.constant 0.000000e+00 : f32
    %58 = vector.broadcast %cst_22 : f32 to vector<16x128xf32>
    %59 = arith.maximumf %57, %58 : vector<16x128xf32>
    %cst_23 = arith.constant dense<0.000000e+00> : vector<16x33xf32>
    %60 = tpu.matmul %59, %3, %cst_23 {dimension_numbers = #tpu.dot_dimension_numbers<[1], [0], [0], [1], [0, 0, 1, 1], [], []>} : vector<16x128xf32>, vector<128x33xf32>, vector<16x33xf32> -> vector<16x33xf32>
    %61 = vector.broadcast %4 : vector<1x33xf32> to vector<16x33xf32>
    %62 = arith.addf %60, %61 : vector<16x33xf32>
    %63 = vector.extract_strided_slice %6 {offsets = [0, 0], sizes = [16, 1], strides = [1, 1]} : vector<16x4xf32> to vector<16x1xf32>
    %64 = vector.extract_strided_slice %23 {offsets = [0, 32], sizes = [16, 1], strides = [1, 1]} : vector<16x33xf32> to vector<16x1xf32>
    %65 = arith.mulf %63, %64 : vector<16x1xf32>
    %cst_24 = arith.constant 0.000000e+00 : f32
    %cst_25 = arith.constant 1.000000e+00 : f32
    %66 = vector.broadcast %cst_24 : f32 to vector<16x1xf32>
    %67 = arith.maximumf %66, %65 : vector<16x1xf32>
    %68 = vector.broadcast %cst_25 : f32 to vector<16x1xf32>
    %69 = arith.minimumf %68, %67 : vector<16x1xf32>
    %70 = vector.extract_strided_slice %6 {offsets = [0, 1], sizes = [16, 1], strides = [1, 1]} : vector<16x4xf32> to vector<16x1xf32>
    %71 = vector.extract_strided_slice %36 {offsets = [0, 32], sizes = [16, 1], strides = [1, 1]} : vector<16x33xf32> to vector<16x1xf32>
    %72 = arith.mulf %70, %71 : vector<16x1xf32>
    %cst_26 = arith.constant 0.000000e+00 : f32
    %cst_27 = arith.constant 1.000000e+00 : f32
    %73 = vector.broadcast %cst_26 : f32 to vector<16x1xf32>
    %74 = arith.maximumf %73, %72 : vector<16x1xf32>
    %75 = vector.broadcast %cst_27 : f32 to vector<16x1xf32>
    %76 = arith.minimumf %75, %74 : vector<16x1xf32>
    %77 = vector.extract_strided_slice %6 {offsets = [0, 2], sizes = [16, 1], strides = [1, 1]} : vector<16x4xf32> to vector<16x1xf32>
    %78 = vector.extract_strided_slice %49 {offsets = [0, 32], sizes = [16, 1], strides = [1, 1]} : vector<16x33xf32> to vector<16x1xf32>
    %79 = arith.mulf %77, %78 : vector<16x1xf32>
    %cst_28 = arith.constant 0.000000e+00 : f32
    %cst_29 = arith.constant 1.000000e+00 : f32
    %80 = vector.broadcast %cst_28 : f32 to vector<16x1xf32>
    %81 = arith.maximumf %80, %79 : vector<16x1xf32>
    %82 = vector.broadcast %cst_29 : f32 to vector<16x1xf32>
    %83 = arith.minimumf %82, %81 : vector<16x1xf32>
    %84 = vector.extract_strided_slice %6 {offsets = [0, 3], sizes = [16, 1], strides = [1, 1]} : vector<16x4xf32> to vector<16x1xf32>
    %85 = vector.extract_strided_slice %62 {offsets = [0, 32], sizes = [16, 1], strides = [1, 1]} : vector<16x33xf32> to vector<16x1xf32>
    %86 = arith.mulf %84, %85 : vector<16x1xf32>
    %cst_30 = arith.constant 0.000000e+00 : f32
    %cst_31 = arith.constant 1.000000e+00 : f32
    %87 = vector.broadcast %cst_30 : f32 to vector<16x1xf32>
    %88 = arith.maximumf %87, %86 : vector<16x1xf32>
    %89 = vector.broadcast %cst_31 : f32 to vector<16x1xf32>
    %90 = arith.minimumf %89, %88 : vector<16x1xf32>
    %91 = arith.maximumf %69, %76 : vector<16x1xf32>
    %92 = arith.maximumf %91, %83 : vector<16x1xf32>
    %93 = arith.maximumf %92, %90 : vector<16x1xf32>
    %94 = arith.subf %69, %93 : vector<16x1xf32>
    %95 = math.exp %94 : vector<16x1xf32>
    %96 = arith.subf %76, %93 : vector<16x1xf32>
    %97 = math.exp %96 : vector<16x1xf32>
    %98 = arith.subf %83, %93 : vector<16x1xf32>
    %99 = math.exp %98 : vector<16x1xf32>
    %100 = arith.subf %90, %93 : vector<16x1xf32>
    %101 = math.exp %100 : vector<16x1xf32>
    %102 = arith.addf %95, %97 : vector<16x1xf32>
    %103 = arith.addf %102, %99 : vector<16x1xf32>
    %104 = arith.addf %103, %101 : vector<16x1xf32>
    %cst_32 = arith.constant 1.000000e+00 : f32
    %105 = vector.broadcast %cst_32 : f32 to vector<16x1xf32>
    %106 = arith.divf %105, %104 : vector<16x1xf32>
    %107 = arith.mulf %95, %106 : vector<16x1xf32>
    %c0_33 = arith.constant 0 : index
    %c0_34 = arith.constant 0 : index
    %c0_35 = arith.constant 0 : index
    %108 = vector.load %arg10[%c0_33, %c0_34, %c0_35] : memref<1x16x4xf32, #tpu.memory_space<vmem>>, vector<1x16x1xf32>
    %109 = vector.shape_cast %108 : vector<1x16x1xf32> to vector<16x1xf32>
    %110 = vector.shape_cast %107 : vector<16x1xf32> to vector<1x16x1xf32>
    tpu.vector_store %arg10[%c0_33, %c0_34, %c0_35], %110 {strides = array<i32>} : memref<1x16x4xf32, #tpu.memory_space<vmem>>, vector<1x16x1xf32>,
    %111 = vector.extract_strided_slice %23 {offsets = [0, 0], sizes = [16, 32], strides = [1, 1]} : vector<16x33xf32> to vector<16x32xf32>
    %112 = vector.broadcast %107 : vector<16x1xf32> to vector<16x32xf32>
    %113 = arith.mulf %111, %112 : vector<16x32xf32>
    %114 = arith.mulf %97, %106 : vector<16x1xf32>
    %c0_36 = arith.constant 0 : index
    %c0_37 = arith.constant 0 : index
    %c1 = arith.constant 1 : index
    %115 = vector.load %arg10[%c0_36, %c0_37, %c1] : memref<1x16x4xf32, #tpu.memory_space<vmem>>, vector<1x16x1xf32>
    %116 = vector.shape_cast %115 : vector<1x16x1xf32> to vector<16x1xf32>
    %117 = vector.shape_cast %114 : vector<16x1xf32> to vector<1x16x1xf32>
    tpu.vector_store %arg10[%c0_36, %c0_37, %c1], %117 {strides = array<i32>} : memref<1x16x4xf32, #tpu.memory_space<vmem>>, vector<1x16x1xf32>,
    %118 = vector.extract_strided_slice %36 {offsets = [0, 0], sizes = [16, 32], strides = [1, 1]} : vector<16x33xf32> to vector<16x32xf32>
    %119 = vector.broadcast %114 : vector<16x1xf32> to vector<16x32xf32>
    %120 = arith.mulf %118, %119 : vector<16x32xf32>
    %121 = arith.addf %113, %120 : vector<16x32xf32>
    %122 = arith.mulf %99, %106 : vector<16x1xf32>
    %c0_38 = arith.constant 0 : index
    %c0_39 = arith.constant 0 : index
    %c2 = arith.constant 2 : index
    %123 = vector.load %arg10[%c0_38, %c0_39, %c2] : memref<1x16x4xf32, #tpu.memory_space<vmem>>, vector<1x16x1xf32>
    %124 = vector.shape_cast %123 : vector<1x16x1xf32> to vector<16x1xf32>
    %125 = vector.shape_cast %122 : vector<16x1xf32> to vector<1x16x1xf32>
    tpu.vector_store %arg10[%c0_38, %c0_39, %c2], %125 {strides = array<i32>} : memref<1x16x4xf32, #tpu.memory_space<vmem>>, vector<1x16x1xf32>,
    %126 = vector.extract_strided_slice %49 {offsets = [0, 0], sizes = [16, 32], strides = [1, 1]} : vector<16x33xf32> to vector<16x32xf32>
    %127 = vector.broadcast %122 : vector<16x1xf32> to vector<16x32xf32>
    %128 = arith.mulf %126, %127 : vector<16x32xf32>
    %129 = arith.addf %121, %128 : vector<16x32xf32>
    %130 = arith.mulf %101, %106 : vector<16x1xf32>
    %c0_40 = arith.constant 0 : index
    %c0_41 = arith.constant 0 : index
    %c3 = arith.constant 3 : index
    %131 = vector.load %arg10[%c0_40, %c0_41, %c3] : memref<1x16x4xf32, #tpu.memory_space<vmem>>, vector<1x16x1xf32>
    %132 = vector.shape_cast %131 : vector<1x16x1xf32> to vector<16x1xf32>
    %133 = vector.shape_cast %130 : vector<16x1xf32> to vector<1x16x1xf32>
    tpu.vector_store %arg10[%c0_40, %c0_41, %c3], %133 {strides = array<i32>} : memref<1x16x4xf32, #tpu.memory_space<vmem>>, vector<1x16x1xf32>,
    %134 = vector.extract_strided_slice %62 {offsets = [0, 0], sizes = [16, 32], strides = [1, 1]} : vector<16x33xf32> to vector<16x32xf32>
    %135 = vector.broadcast %130 : vector<16x1xf32> to vector<16x32xf32>
    %136 = arith.mulf %134, %135 : vector<16x32xf32>
    %137 = arith.addf %129, %136 : vector<16x32xf32>
    %c0_42 = arith.constant 0 : index
    %c0_43 = arith.constant 0 : index
    %c0_44 = arith.constant 0 : index
    %138 = vector.load %arg9[%c0_42, %c0_43, %c0_44] : memref<1x16x32xf32, #tpu.memory_space<vmem>>, vector<1x16x32xf32>
    %139 = vector.shape_cast %138 : vector<1x16x32xf32> to vector<16x32xf32>
    %140 = vector.shape_cast %137 : vector<16x32xf32> to vector<1x16x32xf32>
    tpu.vector_store %arg9[%c0_42, %c0_43, %c0_44], %140 {strides = array<i32>} : memref<1x16x32xf32, #tpu.memory_space<vmem>>, vector<1x16x32xf32>,
    return
  }
  func.func @transform_0(%arg0: i32, %arg1: i32) -> (i32, i32, i32, i32) {
    %c0_i32 = arith.constant 0 : i32
    %c0_i32_0 = arith.constant 0 : i32
    %c0_i32_1 = arith.constant 0 : i32
    return %arg0, %c0_i32, %arg1, %c0_i32_0 : i32, i32, i32, i32
  }
  func.func @transform_1(%arg0: i32, %arg1: i32) -> (i32, i32, i32) {
    %c0_i32 = arith.constant 0 : i32
    %c0_i32_0 = arith.constant 0 : i32
    return %arg0, %arg1, %c0_i32 : i32, i32, i32
  }
  func.func @transform_2(%arg0: i32, %arg1: i32) -> (i32, i32) {
    %c0_i32 = arith.constant 0 : i32
    %c0_i32_0 = arith.constant 0 : i32
    %c0_i32_1 = arith.constant 0 : i32
    return %c0_i32, %c0_i32_0 : i32, i32
  }
  func.func @transform_3(%arg0: i32, %arg1: i32) -> (i32, i32) {
    %c0_i32 = arith.constant 0 : i32
    %c0_i32_0 = arith.constant 0 : i32
    %c0_i32_1 = arith.constant 0 : i32
    return %c0_i32, %c0_i32_0 : i32, i32
  }
  func.func @transform_4(%arg0: i32, %arg1: i32) -> (i32, i32) {
    %c0_i32 = arith.constant 0 : i32
    %c0_i32_0 = arith.constant 0 : i32
    %c0_i32_1 = arith.constant 0 : i32
    return %c0_i32, %c0_i32_0 : i32, i32
  }
  func.func @transform_5(%arg0: i32, %arg1: i32) -> (i32, i32) {
    %c0_i32 = arith.constant 0 : i32
    %c0_i32_0 = arith.constant 0 : i32
    %c0_i32_1 = arith.constant 0 : i32
    return %c0_i32, %c0_i32_0 : i32, i32
  }
  func.func @transform_6(%arg0: i32, %arg1: i32) -> (i32, i32) {
    %c0_i32 = arith.constant 0 : i32
    %c0_i32_0 = arith.constant 0 : i32
    %c0_i32_1 = arith.constant 0 : i32
    return %c0_i32, %c0_i32_0 : i32, i32
  }
  func.func @transform_7(%arg0: i32, %arg1: i32) -> (i32, i32, i32) {
    %c0_i32 = arith.constant 0 : i32
    %c0_i32_0 = arith.constant 0 : i32
    return %arg0, %arg1, %c0_i32 : i32, i32, i32
  }
  func.func @transform_8(%arg0: i32, %arg1: i32) -> (i32, i32, i32) {
    %c0_i32 = arith.constant 0 : i32
    %c0_i32_0 = arith.constant 0 : i32
    return %arg0, %arg1, %c0_i32 : i32, i32, i32
  }
}

</mosaic_0001>

<llo_original>
// kernel: tpu_custom_call.1
$region0: #{tpu_custom_call.1}
  #allocation0 [shape = 'u32[]', space=smem, size = 0x4, offset = 0x4, fixed_abs, tag = 'smem constant byte address 0x4 - core index']
  #allocation1 [shape = 'u32[144,128]{1,0:T(1,128)}', space=vmem, size = 0x12000, scoped, tag = 'internal scratch']
  %s0 = inlined_call_operand.vmem [shape: f32[2,4,16,32], index: 0, kind: input, shape index: {}]
  %s1 = inlined_call_operand.vmem [shape: f32[2,16,4], index: 1, kind: input, shape index: {}]
  %s2 = inlined_call_operand.vmem [shape: f32[32,128], index: 2, kind: input, shape index: {}]
  %s3 = inlined_call_operand.vmem [shape: f32[1,128], index: 3, kind: input, shape index: {}]
  %s4 = inlined_call_operand.vmem [shape: f32[1,128], index: 4, kind: input, shape index: {}]
  %s5 = inlined_call_operand.vmem [shape: f32[128,33], index: 5, kind: input, shape index: {}]
  %s6 = inlined_call_operand.vmem [shape: f32[1,33], index: 6, kind: input, shape index: {}]
  %s7 = inlined_call_operand.hbm [shape: f32[2,16,32], index: 7, kind: output, shape index: {0}]
  %s8 = inlined_call_operand.vmem [shape: f32[2,16,4], index: 8, kind: output, shape index: {1}]
  %9 = xla_tuple %s7, %s8
  %s10 = sld [smem:[#allocation0]]
  $region69: #{tpu_custom_call.1} parent=0
    _
  %s12 = ssub.s32 1, %s10
  %s13 = scalar_select 0, %s12, %s10
  $region1: #{tpu_custom_call.1} parent=0
    #allocation2 [shape = 'u8[16384]{0}', space=vmem, size = 0x4000, scoped, tag = 'output window, operand 0']
    #allocation3 [shape = 's32[2]{0}', space=sflag, size = 0x8, scoped, tag = 'scoped memory for tpu_custom_call.1']
    %14 = vsyncpa [#allocation3], 0
    %s15 = scalar_lea.sflag [#allocation3], 1
    %16 = vsyncpa %s15, 0
    loop: start=0, step=1, limit=4
    $region2: #{tpu_custom_call.1} parent=1 // loop_pre_header
      _
    $region3: #{tpu_custom_call.1} parent=1 // loop_header
      %s18 = sphi 0, %s22
      %p19 = scmp.ge.s32.totalorder %s18, 4
      %s25 = sphi 0, %s37
      %s26 = sphi 0, %s33
      %s27 = sphi 0, %s25
      %s28 = sphi 0, %s26
      %s29 = sphi 0, %s27
      %s30 = sphi 0, %s28
      %s42 = sphi 0, %s44
      %s45 = sphi 0, %s42
      %s46 = sphi 0, %s45
      %s62 = sphi 0, %s46
      %s70 = sphi 0, %s72
      %s73 = sphi 0, %s70
      %s74 = sphi 0, %s73
      %s90 = sphi 0, %s74
      %s94 = sphi 0, %s94
      %s96 = sphi 0, %s94
      %s97 = sphi 0, %s96
      %s111 = sphi 0, %s97
      %s115 = sphi 0, %s115
      %s117 = sphi 0, %s115
      %s118 = sphi 0, %s117
      %s132 = sphi 0, %s118
      %s136 = sphi 0, %s136
      %s138 = sphi 0, %s136
      %s139 = sphi 0, %s138
      %s153 = sphi 0, %s139
      %s157 = sphi 0, %s157
      %s159 = sphi 0, %s157
      %s160 = sphi 0, %s159
      %s174 = sphi 0, %s160
      %s178 = sphi 0, %s178
      %s180 = sphi 0, %s178
      %s181 = sphi 0, %s180
      %s195 = sphi 0, %s181
      %s203 = sphi 0, %s205
      %s206 = sphi 0, %s203
      %s207 = sphi 0, %s206
      %s223 = sphi 0, %s207
      %s231 = sphi 0, %s233
      %s234 = sphi 0, %s231
      %s235 = sphi 0, %s234
      %s251 = sphi 0, %s235
    $region4: #{tpu_custom_call.1} parent=1 // loop_header_branch
      %21 = sbr.rel (%p19) target = $region8
    $region5: #{tpu_custom_call.1} parent=1 // loop_body
      %s23 = ssub.s32 %s18, 1
      %s24 = ssub.s32 %s18, 2
      %s31 = sadd.s32 1, %s26
      %p32 = scmp.ge.s32.totalorder %s31, 1
      %s33 = scalar_select %p32, 0, %s31
      %s34 = sadd.s32 1, %s25
      %s35 = scalar_select %p32, %s34, %s25
      %p36 = scmp.ge.s32.totalorder %s35, 2
      %s37 = scalar_select %p36, 0, %s35
      %s38 = ssub.s32 %s25, %s37
      %s39 = ssub.s32 %s26, %s33
      %s40 = sor.u32 %s38, %s39
      %p41 = scmp.eq.s32.totalorder %s40, 0
      %s43 = sadd.s32 %s42, 1
      %s44 = scalar_select %p41, %s42, %s43
      %p47 = pneg %p41
      %p48 = scmp.eq.s32.totalorder %s18, 1
      %p49 = por %p47, %p48
      %p50 = scmp.ne.s32.totalorder %s42, %s45
      %p51 = scmp.eq.s32.totalorder %s18, 0
      %p52 = por %p50, %p51
      %p53 = scmp.ne.s32.totalorder %s42, %s45
      %p54 = scmp.eq.s32.totalorder %s23, 1
      %p55 = por %p53, %p54
      %p56 = scmp.ne.s32.totalorder %s45, %s46
      %p57 = scmp.eq.s32.totalorder %s23, 0
      %p58 = por %p56, %p57
      %p59 = scmp.ne.s32.totalorder %s45, %s46
      %p60 = scmp.eq.s32.totalorder %s24, 1
      %p61 = por %p59, %p60
      %p63 = scmp.ne.s32.totalorder %s46, %s62
      %p64 = scmp.eq.s32.totalorder %s24, 0
      %p65 = por %p63, %p64
      %s66 = ssub.s32 %s25, %s37
      %s67 = ssub.s32 %s26, %s33
      %s68 = sor.u32 %s66, %s67
      %p69 = scmp.eq.s32.totalorder %s68, 0
      %s71 = sadd.s32 %s70, 1
      %s72 = scalar_select %p69, %s70, %s71
      %p75 = pneg %p69
      %p76 = scmp.eq.s32.totalorder %s18, 1
      %p77 = por %p75, %p76
      %p78 = scmp.ne.s32.totalorder %s70, %s73
      %p79 = scmp.eq.s32.totalorder %s18, 0
      %p80 = por %p78, %p79
      %p81 = scmp.ne.s32.totalorder %s70, %s73
      %p82 = scmp.eq.s32.totalorder %s23, 1
      %p83 = por %p81, %p82
      %p84 = scmp.ne.s32.totalorder %s73, %s74
      %p85 = scmp.eq.s32.totalorder %s23, 0
      %p86 = por %p84, %p85
      %p87 = scmp.ne.s32.totalorder %s73, %s74
      %p88 = scmp.eq.s32.totalorder %s24, 1
      %p89 = por %p87, %p88
      %p91 = scmp.ne.s32.totalorder %s74, %s90
      %p92 = scmp.eq.s32.totalorder %s24, 0
      %p93 = por %p91, %p92
      %s95 = sadd.s32 %s94, 1
      %p98 = scmp.eq.s32.totalorder %s18, 1
      %p99 = scmp.ne.s32.totalorder %s94, %s96
      %p100 = scmp.eq.s32.totalorder %s18, 0
      %p101 = por %p99, %p100
      %p102 = scmp.ne.s32.totalorder %s94, %s96
      %p103 = scmp.eq.s32.totalorder %s23, 1
      %p104 = por %p102, %p103
      %p105 = scmp.ne.s32.totalorder %s96, %s97
      %p106 = scmp.eq.s32.totalorder %s23, 0
      %p107 = por %p105, %p106
      %p108 = scmp.ne.s32.totalorder %s96, %s97
      %p109 = scmp.eq.s32.totalorder %s24, 1
      %p110 = por %p108, %p109
      %p112 = scmp.ne.s32.totalorder %s97, %s111
      %p113 = scmp.eq.s32.totalorder %s24, 0
      %p114 = por %p112, %p113
      %s116 = sadd.s32 %s115, 1
      %p119 = scmp.eq.s32.totalorder %s18, 1
      %p120 = scmp.ne.s32.totalorder %s115, %s117
      %p121 = scmp.eq.s32.totalorder %s18, 0
      %p122 = por %p120, %p121
      %p123 = scmp.ne.s32.totalorder %s115, %s117
      %p124 = scmp.eq.s32.totalorder %s23, 1
      %p125 = por %p123, %p124
      %p126 = scmp.ne.s32.totalorder %s117, %s118
      %p127 = scmp.eq.s32.totalorder %s23, 0
      %p128 = por %p126, %p127
      %p129 = scmp.ne.s32.totalorder %s117, %s118
      %p130 = scmp.eq.s32.totalorder %s24, 1
      %p131 = por %p129, %p130
      %p133 = scmp.ne.s32.totalorder %s118, %s132
      %p134 = scmp.eq.s32.totalorder %s24, 0
      %p135 = por %p133, %p134
      %s137 = sadd.s32 %s136, 1
      %p140 = scmp.eq.s32.totalorder %s18, 1
      %p141 = scmp.ne.s32.totalorder %s136, %s138
      %p142 = scmp.eq.s32.totalorder %s18, 0
      %p143 = por %p141, %p142
      %p144 = scmp.ne.s32.totalorder %s136, %s138
      %p145 = scmp.eq.s32.totalorder %s23, 1
      %p146 = por %p144, %p145
      %p147 = scmp.ne.s32.totalorder %s138, %s139
      %p148 = scmp.eq.s32.totalorder %s23, 0
      %p149 = por %p147, %p148
      %p150 = scmp.ne.s32.totalorder %s138, %s139
      %p151 = scmp.eq.s32.totalorder %s24, 1
      %p152 = por %p150, %p151
      %p154 = scmp.ne.s32.totalorder %s139, %s153
      %p155 = scmp.eq.s32.totalorder %s24, 0
      %p156 = por %p154, %p155
      %s158 = sadd.s32 %s157, 1
      %p161 = scmp.eq.s32.totalorder %s18, 1
      %p162 = scmp.ne.s32.totalorder %s157, %s159
      %p163 = scmp.eq.s32.totalorder %s18, 0
      %p164 = por %p162, %p163
      %p165 = scmp.ne.s32.totalorder %s157, %s159
      %p166 = scmp.eq.s32.totalorder %s23, 1
      %p167 = por %p165, %p166
      %p168 = scmp.ne.s32.totalorder %s159, %s160
      %p169 = scmp.eq.s32.totalorder %s23, 0
      %p170 = por %p168, %p169
      %p171 = scmp.ne.s32.totalorder %s159, %s160
      %p172 = scmp.eq.s32.totalorder %s24, 1
      %p173 = por %p171, %p172
      %p175 = scmp.ne.s32.totalorder %s160, %s174
      %p176 = scmp.eq.s32.totalorder %s24, 0
      %p177 = por %p175, %p176
      %s179 = sadd.s32 %s178, 1
      %p182 = scmp.eq.s32.totalorder %s18, 1
      %p183 = scmp.ne.s32.totalorder %s178, %s180
      %p184 = scmp.eq.s32.totalorder %s18, 0
      %p185 = por %p183, %p184
      %p186 = scmp.ne.s32.totalorder %s178, %s180
      %p187 = scmp.eq.s32.totalorder %s23, 1
      %p188 = por %p186, %p187
      %p189 = scmp.ne.s32.totalorder %s180, %s181
      %p190 = scmp.eq.s32.totalorder %s23, 0
      %p191 = por %p189, %p190
      %p192 = scmp.ne.s32.totalorder %s180, %s181
      %p193 = scmp.eq.s32.totalorder %s24, 1
      %p194 = por %p192, %p193
      %p196 = scmp.ne.s32.totalorder %s181, %s195
      %p197 = scmp.eq.s32.totalorder %s24, 0
      %p198 = por %p196, %p197
      %s199 = ssub.s32 %s25, %s37
      %s200 = ssub.s32 %s26, %s33
      %s201 = sor.u32 %s199, %s200
      %p202 = scmp.eq.s32.totalorder %s201, 0
      %s204 = sadd.s32 %s203, 1
      %s205 = scalar_select %p202, %s203, %s204
      %p208 = pneg %p202
      %p209 = scmp.eq.s32.totalorder %s18, 1
      %p210 = por %p208, %p209
      %p211 = scmp.ne.s32.totalorder %s203, %s206
      %p212 = scmp.eq.s32.totalorder %s18, 0
      %p213 = por %p211, %p212
      %p214 = scmp.ne.s32.totalorder %s203, %s206
      %p215 = scmp.eq.s32.totalorder %s23, 1
      %p216 = por %p214, %p215
      %p217 = scmp.ne.s32.totalorder %s206, %s207
      %p218 = scmp.eq.s32.totalorder %s23, 0
      %p219 = por %p217, %p218
      %p220 = scmp.ne.s32.totalorder %s206, %s207
      %p221 = scmp.eq.s32.totalorder %s24, 1
      %p222 = por %p220, %p221
      %p224 = scmp.ne.s32.totalorder %s207, %s223
      %p225 = scmp.eq.s32.totalorder %s24, 0
      %p226 = por %p224, %p225
      %s227 = ssub.s32 %s25, %s37
      %s228 = ssub.s32 %s26, %s33
      %s229 = sor.u32 %s227, %s228
      %p230 = scmp.eq.s32.totalorder %s229, 0
      %s232 = sadd.s32 %s231, 1
      %s233 = scalar_select %p230, %s231, %s232
      %p236 = pneg %p230
      %p237 = scmp.eq.s32.totalorder %s18, 1
      %p238 = por %p236, %p237
      %p239 = scmp.ne.s32.totalorder %s231, %s234
      %p240 = scmp.eq.s32.totalorder %s18, 0
      %p241 = por %p239, %p240
      %p242 = scmp.ne.s32.totalorder %s231, %s234
      %p243 = scmp.eq.s32.totalorder %s23, 1
      %p244 = por %p242, %p243
      %p245 = scmp.ne.s32.totalorder %s234, %s235
      %p246 = scmp.eq.s32.totalorder %s23, 0
      %p247 = por %p245, %p246
      %p248 = scmp.ne.s32.totalorder %s234, %s235
      %p249 = scmp.eq.s32.totalorder %s24, 1
      %p250 = por %p248, %p249
      %p252 = scmp.ne.s32.totalorder %s235, %s251
      %p253 = scmp.eq.s32.totalorder %s24, 0
      %p254 = por %p252, %p253
      %p255 = scmp.le.s32.totalorder 1, %s18
      %p256 = scmp.lt.s32.totalorder %s18, 3
      %p257 = pnand %p255, %p256
      %p258 = pneg %p257
      // Predicated region
      $region9: #{tpu_custom_call.1} parent=5 // pred_check
        _
      $region10: #{tpu_custom_call.1} parent=5 // pred_check_branch
        %260 = sbr.rel (%p257) target = $region12
      $region11: #{tpu_custom_call.1} parent=5 // pred_region
        %s261 = ssub.s32 %s18, 1
        // Predicated region
        $region13: #{tpu_custom_call.1} parent=11 // pred_check
          %p262 = pneg %p107
        $region14: #{tpu_custom_call.1} parent=11 // pred_check_branch
          %264 = sbr.rel (%p262) target = $region16
        $region15: #{tpu_custom_call.1} parent=11 // pred_region
          _
        $region16: #{tpu_custom_call.1} parent=11 // pred_fallthru
          _
        // Predicated region
        $region17: #{tpu_custom_call.1} parent=11 // pred_check
          %p265 = pneg %p128
        $region18: #{tpu_custom_call.1} parent=11 // pred_check_branch
          %267 = sbr.rel (%p265) target = $region20
        $region19: #{tpu_custom_call.1} parent=11 // pred_region
          _
        $region20: #{tpu_custom_call.1} parent=11 // pred_fallthru
          _
        // Predicated region
        $region21: #{tpu_custom_call.1} parent=11 // pred_check
          %p268 = pneg %p149
        $region22: #{tpu_custom_call.1} parent=11 // pred_check_branch
          %270 = sbr.rel (%p268) target = $region24
        $region23: #{tpu_custom_call.1} parent=11 // pred_region
          _
        $region24: #{tpu_custom_call.1} parent=11 // pred_fallthru
          _
        // Predicated region
        $region25: #{tpu_custom_call.1} parent=11 // pred_check
          %p271 = pneg %p170
        $region26: #{tpu_custom_call.1} parent=11 // pred_check_branch
          %273 = sbr.rel (%p271) target = $region28
        $region27: #{tpu_custom_call.1} parent=11 // pred_region
          _
        $region28: #{tpu_custom_call.1} parent=11 // pred_fallthru
          _
        // Predicated region
        $region29: #{tpu_custom_call.1} parent=11 // pred_check
          %p274 = pneg %p191
        $region30: #{tpu_custom_call.1} parent=11 // pred_check_branch
          %276 = sbr.rel (%p274) target = $region32
        $region31: #{tpu_custom_call.1} parent=11 // pred_region
          _
        $region32: #{tpu_custom_call.1} parent=11 // pred_fallthru
          _
      $region12: #{tpu_custom_call.1} parent=5 // pred_fallthru
        _
      %p277 = scmp.lt.s32.totalorder %s18, 2
      // Predicated region
      $region33: #{tpu_custom_call.1} parent=5 // pred_check
        %p278 = pneg %p277
      $region34: #{tpu_custom_call.1} parent=5 // pred_check_branch
        %280 = sbr.rel (%p278) target = $region36
      $region35: #{tpu_custom_call.1} parent=5 // pred_region
        // Predicated region
        $region37: #{tpu_custom_call.1} parent=35 // pred_check
          %p281 = pneg %p52
        $region38: #{tpu_custom_call.1} parent=35 // pred_check_branch
          %283 = sbr.rel (%p281) target = $region40
        $region39: #{tpu_custom_call.1} parent=35 // pred_region
          %s284 = smul.u32 2, %s26
          %p285 = scmp.lt.s32.totalorder %s25, 1
          %s286 = scalar_select %p285, %s25, 1
          %p287 = scmp.lt.s32.totalorder %s284, 1
          %s288 = scalar_select %p287, %s284, 1
          %s289 = smul.addr %s286, 8
          %s290 = sadd.s32 %s288, %s289
          %s291 = smul.addr %s290, 8
          %s292 = scalar_lea.vmem %s0, %s291
          %s293 = smul.u32 2, %s26
        $region40: #{tpu_custom_call.1} parent=35 // pred_fallthru
          _
        // Predicated region
        $region41: #{tpu_custom_call.1} parent=35 // pred_check
          %p294 = pneg %p80
        $region42: #{tpu_custom_call.1} parent=35 // pred_check_branch
          %296 = sbr.rel (%p294) target = $region44
        $region43: #{tpu_custom_call.1} parent=35 // pred_region
          %s297 = smul.u32 2, %s26
          %p298 = scmp.lt.s32.totalorder %s25, 1
          %s299 = scalar_select %p298, %s25, 1
          %p300 = scmp.lt.s32.totalorder %s297, 1
          %s301 = scalar_select %p300, %s297, 1
          %s302 = smul.addr %s299, 2
          %s303 = sadd.s32 %s301, %s302
          %s304 = smul.addr %s303, 8
          %s305 = scalar_lea.vmem %s1, %s304
          %s306 = smul.u32 2, %s26
        $region44: #{tpu_custom_call.1} parent=35 // pred_fallthru
          _
      $region36: #{tpu_custom_call.1} parent=5 // pred_fallthru
        _
      %p307 = scmp.le.s32.totalorder 1, %s18
      %p308 = scmp.lt.s32.totalorder %s18, 3
      %p309 = pnand %p307, %p308
      %p310 = pneg %p309
      // Predicated region
      $region45: #{tpu_custom_call.1} parent=5 // pred_check
        _
      $region46: #{tpu_custom_call.1} parent=5 // pred_check_branch
        %312 = sbr.rel (%p309) target = $region48
      $region47: #{tpu_custom_call.1} parent=5 // pred_region
        %s313 = ssub.s32 %s18, 1
        %s314 = smul.u32 2, %s28
        %p315 = scmp.lt.s32.totalorder %s27, 1
        %s316 = scalar_select %p315, %s27, 1
        %p317 = scmp.lt.s32.totalorder %s314, 1
        %s318 = scalar_select %p317, %s314, 1
        %s319 = smul.addr %s316, 8
        %s320 = sadd.s32 %s318, %s319
        %s321 = smul.addr %s320, 8
        %s322 = scalar_lea.vmem %s0, %s321
        %p323 = pneg %p58
        %p324 = pneg %p55
        %s325 = smul.u32 2, %s28
        %p326 = scmp.lt.s32.totalorder %s27, 1
        %s327 = scalar_select %p326, %s27, 1
        %p328 = scmp.lt.s32.totalorder %s325, 1
        %s329 = scalar_select %p328, %s325, 1
        %s330 = smul.addr %s327, 2
        %s331 = sadd.s32 %s329, %s330
        %s332 = smul.addr %s331, 8
        %s333 = scalar_lea.vmem %s1, %s332
        %p334 = pneg %p86
        %p335 = pneg %p83
        %p336 = pneg %p107
        %p337 = pneg %p104
        %p338 = pneg %p128
        %p339 = pneg %p125
        %p340 = pneg %p149
        %p341 = pneg %p146
        %p342 = pneg %p170
        %p343 = pneg %p167
        %p344 = pneg %p191
        %p345 = pneg %p188
        %p346 = pneg %p219
        %p347 = pneg %p216
        %s348 = sand.u32 %s206, 1
        %s349 = scalar_lea.sflag [#allocation3], %s348
        %s350 = sand.u32 %s206, 1
        %s351 = smul.addr %s350, 16
        %s352 = scalar_lea.vmem [#allocation2], %s351
        %p353 = pneg %p247
        %p354 = pneg %p244
        %s355 = smul.u32 2, %s28
        %p356 = scmp.lt.s32.totalorder %s27, 1
        %s357 = scalar_select %p356, %s27, 1
        %p358 = scmp.lt.s32.totalorder %s355, 1
        %s359 = scalar_select %p358, %s355, 1
        %s360 = smul.addr %s357, 2
        %s361 = sadd.s32 %s359, %s360
        %s362 = smul.addr %s361, 8
        %s363 = scalar_lea.vmem %s8, %s362
        %s364 = smul.u32 2, %s28
        %p365 = scmp.lt.s32.totalorder %s27, 1
        %s366 = scalar_select %p365, %s27, 1
        %p367 = scmp.lt.s32.totalorder %s364, 1
        %s368 = scalar_select %p367, %s364, 1
        %s369 = smul.addr %s366, 8
        %s370 = sadd.s32 %s368, %s369
        %s371 = smul.addr %s370, 8
        %s372 = scalar_lea.vmem %s0, %s371
        %s373 = smul.u32 2, %s28
        %s374 = smul.u32 2, %s28
        %p375 = scmp.lt.s32.totalorder %s27, 1
        %s376 = scalar_select %p375, %s27, 1
        %p377 = scmp.lt.s32.totalorder %s374, 1
        %s378 = scalar_select %p377, %s374, 1
        %s379 = smul.addr %s376, 2
        %s380 = sadd.s32 %s378, %s379
        %s381 = smul.addr %s380, 8
        %s382 = scalar_lea.vmem %s1, %s381
        %s383 = smul.u32 2, %s28
        %s384 = smul.u32 2, %s28
        %s385 = smul.u32 2, %s28
        %p386 = scmp.lt.s32.totalorder %s27, 1
        %s387 = scalar_select %p386, %s27, 1
        %p388 = scmp.lt.s32.totalorder %s385, 1
        %s389 = scalar_select %p388, %s385, 1
        %s390 = smul.addr %s387, 2
        %s391 = sadd.s32 %s389, %s390
        %s392 = smul.addr %s391, 8
        %s393 = scalar_lea.vmem %s8, %s392
        %s394 = smul.u32 2, %s28
        %v395 = vld [vmem:[%s2] sm:$0xff]
        %v396 = vld [vmem:[%s2 + $0x8] sm:$0xff]
        %v397 = vld [vmem:[%s2 + $0x10] sm:$0xff]
        %v398 = vld [vmem:[%s2 + $0x18] sm:$0xff]
        %v399 = vld [vmem:[%s3] sm:$0x1]
        %v400 = vld [vmem:[%s4] sm:$0x1]
        %v401 = vld [vmem:[%s5] sm:$0xff]
        %v402 = vld [vmem:[%s5 + $0x8] sm:$0xff]
        %v403 = vld [vmem:[%s5 + $0x10] sm:$0xff]
        %v404 = vld [vmem:[%s5 + $0x18] sm:$0xff]
        %v405 = vld [vmem:[%s5 + $0x20] sm:$0xff]
        %v406 = vld [vmem:[%s5 + $0x28] sm:$0xff]
        %v407 = vld [vmem:[%s5 + $0x30] sm:$0xff]
        %v408 = vld [vmem:[%s5 + $0x38] sm:$0xff]
        %v409 = vld [vmem:[%s5 + $0x40] sm:$0xff]
        %v410 = vld [vmem:[%s5 + $0x48] sm:$0xff]
        %v411 = vld [vmem:[%s5 + $0x50] sm:$0xff]
        %v412 = vld [vmem:[%s5 + $0x58] sm:$0xff]
        %v413 = vld [vmem:[%s5 + $0x60] sm:$0xff]
        %v414 = vld [vmem:[%s5 + $0x68] sm:$0xff]
        %v415 = vld [vmem:[%s5 + $0x70] sm:$0xff]
        %v416 = vld [vmem:[%s5 + $0x78] sm:$0xff]
        %v417 = vld [vmem:[%s6] sm:$0x1]
        %v418 = vld [vmem:[%s382] sm:$0xff]
        %v419 = vld [vmem:[%s382 + $0x8] sm:$0xff]
        %v420 = vld [vmem:[%s372] sm:$0xff]
        %v421 = vld [vmem:[%s372 + $0x8] sm:$0xff]
        %v422 = vld [vmem:[%s372 + $0x10] sm:$0xff]
        %v423 = vld [vmem:[%s372 + $0x18] sm:$0xff]
        %v424 = vld [vmem:[%s372 + $0x20] sm:$0xff]
        %v425 = vld [vmem:[%s372 + $0x28] sm:$0xff]
        %v426 = vld [vmem:[%s372 + $0x30] sm:$0xff]
        %v427 = vld [vmem:[%s372 + $0x38] sm:$0xff]
        %vm428 = vcmask 261120
        %v430 = vsel %vm428, %v420, 0
        %v433 = vsel %vm428, %v421, 0
        %v436 = vsel %vm428, %v422, 0
        %v439 = vsel %vm428, %v423, 0
        %v442 = vsel %vm428, %v424, 0
        %v445 = vsel %vm428, %v425, 0
        %v448 = vsel %vm428, %v426, 0
        %v451 = vsel %vm428, %v427, 0
        %453 = vmatprep.subr.mxu0 0.0
        %454 = vmatpush1.msra.mxu0 %v395
        %455 = vmatprep.subr.mxu0 0.0
        %456 = vmatpush1.msra.mxu0 %v396
        %457 = vmatprep.subr.mxu0 0.0
        %458 = vmatpush1.msra.mxu0 %v397
        %459 = vmatprep.subr.mxu0 0.0
        %460 = vmatpush1.msra.mxu0 %v398
        %461 = vmatprep.subr.mxu0 0.0
        %462 = vmatpush1.msra.mxu0 0.0
        %463 = vmatprep.subr.mxu0 0.0
        %464 = vmatpush1.msra.mxu0 0.0
        %465 = vmatprep.subr.mxu0 0.0
        %466 = vmatpush1.msra.mxu0 0.0
        %467 = vmatprep.subr.mxu0 0.0
        %468 = vmatpush1.msra.mxu0 0.0
        %469 = vmatprep.subr.mxu0 0.0
        %470 = vmatpush1.msra.mxu0 0.0
        %471 = vmatprep.subr.mxu0 0.0
        %472 = vmatpush1.msra.mxu0 0.0
        %473 = vmatprep.subr.mxu0 0.0
        %474 = vmatpush1.msra.mxu0 0.0
        %475 = vmatprep.subr.mxu0 0.0
        %476 = vmatpush1.msra.mxu0 0.0
        %477 = vmatprep.subr.mxu0 0.0
        %478 = vmatpush1.msra.mxu0 0.0
        %479 = vmatprep.subr.mxu0 0.0
        %480 = vmatpush1.msra.mxu0 0.0
        %481 = vmatprep.subr.mxu0 0.0
        %482 = vmatpush1.msra.mxu0 0.0
        %483 = vmatprep.subr.mxu0 0.0
        %484 = vmatpush1.msra.mxu0 0.0
        %485 = vmatprep.subr.mxu0 0.0
        %486 = vmatpush1.msra.mxu0 0.0
        %487 = vmatprep.subr.mxu0 0.0
        %488 = vmatpush1.msra.mxu0 0.0
        %489 = vmatprep.subr.mxu0 0.0
        %490 = vmatpush1.msra.mxu0 0.0
        %491 = vmatprep.subr.mxu0 0.0
        %492 = vmatpush1.msra.mxu0 0.0
        %493 = vmatprep.subr.mxu0 0.0
        %494 = vmatpush1.msra.mxu0 0.0
        %495 = vmatprep.subr.mxu0 0.0
        %496 = vmatpush1.msra.mxu0 0.0
        %497 = vmatprep.subr.mxu0 0.0
        %498 = vmatpush1.msra.mxu0 0.0
        %499 = vmatprep.subr.mxu0 0.0
        %500 = vmatpush1.msra.mxu0 0.0
        %501 = vmatprep.subr.mxu0 0.0
        %502 = vmatpush1.msra.mxu0 0.0
        %503 = vmatprep.subr.mxu0 0.0
        %504 = vmatpush1.msra.mxu0 0.0
        %505 = vmatprep.subr.mxu0 0.0
        %506 = vmatpush1.msra.mxu0 0.0
        %507 = vmatprep.subr.mxu0 0.0
        %508 = vmatpush1.msra.mxu0 0.0
        %509 = vmatprep.subr.mxu0 0.0
        %510 = vmatpush1.msra.mxu0 0.0
        %511 = vmatprep.subr.mxu0 0.0
        %512 = vmatpush1.msra.mxu0 0.0
        %513 = vmatprep.subr.mxu0 0.0
        %514 = vmatpush1.msra.mxu0 0.0
        %515 = vmatprep.subr.mxu0 0.0
        %516 = vmatpush1.msra.mxu0 0.0
        %517 = vmatprep.mubr.f32.mxu0 0.0
        %518 = vmatmul.mubr.f32.gmra.mrb[0].mxu0 %v430
        %v519 = vpop.f32.mrb[0].mxu0
        %v520 = vadd.f32 0.0, %v519
        %v521 = vpop.f32.mrb[0].mxu0
        %522 = vmatprep.mubr.f32.mxu0 0.0
        %523 = vmatmul.mubr.f32.gmra.mrb[0].mxu0 %v433
        %v524 = vpop.f32.mrb[0].mxu0
        %v525 = vadd.f32 0.0, %v524
        %v526 = vpop.f32.mrb[0].mxu0
        %527 = vmatprep.mubr.f32.mxu0 0.0
        %528 = vmatmul.mubr.f32.gmra.mrb[0].mxu0 %v436
        %v529 = vpop.f32.mrb[0].mxu0
        %v530 = vadd.f32 0.0, %v529
        %v531 = vpop.f32.mrb[0].mxu0
        %532 = vmatprep.mubr.f32.mxu0 0.0
        %533 = vmatmul.mubr.f32.gmra.mrb[0].mxu0 %v439
        %v534 = vpop.f32.mrb[0].mxu0
        %v535 = vadd.f32 0.0, %v534
        %v536 = vpop.f32.mrb[0].mxu0
        %537 = vmatprep.mubr.f32.mxu0 0.0
        %538 = vmatmul.mubr.f32.gmra.mrb[0].mxu0 %v442
        %v539 = vpop.f32.mrb[0].mxu0
        %v540 = vadd.f32 0.0, %v539
        %v541 = vpop.f32.mrb[0].mxu0
        %542 = vmatprep.mubr.f32.mxu0 0.0
        %543 = vmatmul.mubr.f32.gmra.mrb[0].mxu0 %v445
        %v544 = vpop.f32.mrb[0].mxu0
        %v545 = vadd.f32 0.0, %v544
        %v546 = vpop.f32.mrb[0].mxu0
        %547 = vmatprep.mubr.f32.mxu0 0.0
        %548 = vmatmul.mubr.f32.gmra.mrb[0].mxu0 %v448
        %v549 = vpop.f32.mrb[0].mxu0
        %v550 = vadd.f32 0.0, %v549
        %v551 = vpop.f32.mrb[0].mxu0
        %552 = vmatprep.mubr.f32.mxu0 0.0
        %553 = vmatmul.mubr.f32.gmra.mrb[0].mxu0 %v451
        %v554 = vpop.f32.mrb[0].mxu0
        %v555 = vadd.f32 0.0, %v554
        %v556 = vpop.f32.mrb[0].mxu0
        %557 = vdwg.mxu0
        %559 = vset.pattern.permute.xlu0 0
        %560 = vperm.xlu0 %559, %v418
        %v561 = vpop.permute.xlu0 %560
        %564 = vset.pattern.permute.xlu0 0
        %565 = vperm.xlu0 %564, %v419
        %v566 = vpop.permute.xlu0 %565
        %v569 = vlaneseq
        %v570 = vshrl.u32 %v569, 7
        %v571 = vsub.s32 0, %v570
        %v572 = vrot.slane %v399, %v571
        %v574 = vmul.f32 %v561, %v572
        %v575 = vmul.f32 %v566, %v572
        %v576 = vadd.f32 %v520, %v574
        %v577 = vadd.f32 %v525, %v575
        %v579 = vlaneseq
        %v580 = vshrl.u32 %v579, 7
        %v581 = vsub.s32 0, %v580
        %v582 = vrot.slane %v400, %v581
        %v584 = vadd.f32 %v576, %v582
        %v585 = vadd.f32 %v577, %v582
        %v586 = vmax.f32 %v584, 0.0
        %v587 = vmax.f32 %v585, 0.0
        %v589 = vlaneseq
        %v590 = vshrl.u32 %v589, 7
        %v591 = vsub.s32 0, %v590
        %v592 = vrot.slane %v417, %v591
        %594 = vmatprep.subr.mxu0 0.0
        %595 = vmatpush1.msra.mxu0 %v401
        %596 = vmatprep.subr.mxu0 0.0
        %597 = vmatpush1.msra.mxu0 %v402
        %598 = vmatprep.subr.mxu0 0.0
        %599 = vmatpush1.msra.mxu0 %v403
        %600 = vmatprep.subr.mxu0 0.0
        %601 = vmatpush1.msra.mxu0 %v404
        %602 = vmatprep.subr.mxu0 0.0
        %603 = vmatpush1.msra.mxu0 %v405
        %604 = vmatprep.subr.mxu0 0.0
        %605 = vmatpush1.msra.mxu0 %v406
        %606 = vmatprep.subr.mxu0 0.0
        %607 = vmatpush1.msra.mxu0 %v407
        %608 = vmatprep.subr.mxu0 0.0
        %609 = vmatpush1.msra.mxu0 %v408
        %610 = vmatprep.subr.mxu0 0.0
        %611 = vmatpush1.msra.mxu0 %v409
        %612 = vmatprep.subr.mxu0 0.0
        %613 = vmatpush1.msra.mxu0 %v410
        %614 = vmatprep.subr.mxu0 0.0
        %615 = vmatpush1.msra.mxu0 %v411
        %616 = vmatprep.subr.mxu0 0.0
        %617 = vmatpush1.msra.mxu0 %v412
        %618 = vmatprep.subr.mxu0 0.0
        %619 = vmatpush1.msra.mxu0 %v413
        %620 = vmatprep.subr.mxu0 0.0
        %621 = vmatpush1.msra.mxu0 %v414
        %622 = vmatprep.subr.mxu0 0.0
        %623 = vmatpush1.msra.mxu0 %v415
        %624 = vmatprep.subr.mxu0 0.0
        %625 = vmatpush1.msra.mxu0 %v416
        %626 = vmatprep.subr.mxu0 0.0
        %627 = vmatpush1.msra.mxu0 0.0
        %628 = vmatprep.subr.mxu0 0.0
        %629 = vmatpush1.msra.mxu0 0.0
        %630 = vmatprep.subr.mxu0 0.0
        %631 = vmatpush1.msra.mxu0 0.0
        %632 = vmatprep.subr.mxu0 0.0
        %633 = vmatpush1.msra.mxu0 0.0
        %634 = vmatprep.subr.mxu0 0.0
        %635 = vmatpush1.msra.mxu0 0.0
        %636 = vmatprep.subr.mxu0 0.0
        %637 = vmatpush1.msra.mxu0 0.0
        %638 = vmatprep.subr.mxu0 0.0
        %639 = vmatpush1.msra.mxu0 0.0
        %640 = vmatprep.subr.mxu0 0.0
        %641 = vmatpush1.msra.mxu0 0.0
        %642 = vmatprep.subr.mxu0 0.0
        %643 = vmatpush1.msra.mxu0 0.0
        %644 = vmatprep.subr.mxu0 0.0
        %645 = vmatpush1.msra.mxu0 0.0
        %646 = vmatprep.subr.mxu0 0.0
        %647 = vmatpush1.msra.mxu0 0.0
        %648 = vmatprep.subr.mxu0 0.0
        %649 = vmatpush1.msra.mxu0 0.0
        %650 = vmatprep.subr.mxu0 0.0
        %651 = vmatpush1.msra.mxu0 0.0
        %652 = vmatprep.subr.mxu0 0.0
        %653 = vmatpush1.msra.mxu0 0.0
        %654 = vmatprep.subr.mxu0 0.0
        %655 = vmatpush1.msra.mxu0 0.0
        %656 = vmatprep.subr.mxu0 0.0
        %657 = vmatpush1.msra.mxu0 0.0
        %658 = vmatprep.mubr.f32.mxu0 0.0
        %659 = vmatmul.mubr.f32.gmra.mrb[0].mxu0 %v586
        %v660 = vpop.f32.mrb[0].mxu0
        %v661 = vadd.f32 %v592, %v660
        %v662 = vpop.f32.mrb[0].mxu0
        %663 = vmatprep.mubr.f32.mxu0 0.0
        %664 = vmatmul.mubr.f32.gmra.mrb[0].mxu0 %v587
        %v665 = vpop.f32.mrb[0].mxu0
        %v666 = vadd.f32 %v592, %v665
        %v667 = vpop.f32.mrb[0].mxu0
        %668 = vdwg.mxu0
        %669 = vset.pattern.permute.xlu0 1
        %670 = vperm.xlu0 %669, %v418
        %v671 = vpop.permute.xlu0 %670
        %673 = vset.pattern.permute.xlu0 1
        %674 = vperm.xlu0 %673, %v419
        %v675 = vpop.permute.xlu0 %674
        %v677 = vmul.f32 %v671, %v572
        %v678 = vmul.f32 %v675, %v572
        %v679 = vadd.f32 %v530, %v677
        %v680 = vadd.f32 %v535, %v678
        %v681 = vadd.f32 %v679, %v582
        %v682 = vadd.f32 %v680, %v582
        %v683 = vmax.f32 %v681, 0.0
        %v684 = vmax.f32 %v682, 0.0
        %685 = vmatprep.subr.mxu0 0.0
        %686 = vmatpush1.msra.mxu0 %v401
        %687 = vmatprep.subr.mxu0 0.0
        %688 = vmatpush1.msra.mxu0 %v402
        %689 = vmatprep.subr.mxu0 0.0
        %690 = vmatpush1.msra.mxu0 %v403
        %691 = vmatprep.subr.mxu0 0.0
        %692 = vmatpush1.msra.mxu0 %v404
        %693 = vmatprep.subr.mxu0 0.0
        %694 = vmatpush1.msra.mxu0 %v405
        %695 = vmatprep.subr.mxu0 0.0
        %696 = vmatpush1.msra.mxu0 %v406
        %697 = vmatprep.subr.mxu0 0.0
        %698 = vmatpush1.msra.mxu0 %v407
        %699 = vmatprep.subr.mxu0 0.0
        %700 = vmatpush1.msra.mxu0 %v408
        %701 = vmatprep.subr.mxu0 0.0
        %702 = vmatpush1.msra.mxu0 %v409
        %703 = vmatprep.subr.mxu0 0.0
        %704 = vmatpush1.msra.mxu0 %v410
        %705 = vmatprep.subr.mxu0 0.0
        %706 = vmatpush1.msra.mxu0 %v411
        %707 = vmatprep.subr.mxu0 0.0
        %708 = vmatpush1.msra.mxu0 %v412
        %709 = vmatprep.subr.mxu0 0.0
        %710 = vmatpush1.msra.mxu0 %v413
        %711 = vmatprep.subr.mxu0 0.0
        %712 = vmatpush1.msra.mxu0 %v414
        %713 = vmatprep.subr.mxu0 0.0
        %714 = vmatpush1.msra.mxu0 %v415
        %715 = vmatprep.subr.mxu0 0.0
        %716 = vmatpush1.msra.mxu0 %v416
        %717 = vmatprep.subr.mxu0 0.0
        %718 = vmatpush1.msra.mxu0 0.0
        %719 = vmatprep.subr.mxu0 0.0
        %720 = vmatpush1.msra.mxu0 0.0
        %721 = vmatprep.subr.mxu0 0.0
        %722 = vmatpush1.msra.mxu0 0.0
        %723 = vmatprep.subr.mxu0 0.0
        %724 = vmatpush1.msra.mxu0 0.0
        %725 = vmatprep.subr.mxu0 0.0
        %726 = vmatpush1.msra.mxu0 0.0
        %727 = vmatprep.subr.mxu0 0.0
        %728 = vmatpush1.msra.mxu0 0.0
        %729 = vmatprep.subr.mxu0 0.0
        %730 = vmatpush1.msra.mxu0 0.0
        %731 = vmatprep.subr.mxu0 0.0
        %732 = vmatpush1.msra.mxu0 0.0
        %733 = vmatprep.subr.mxu0 0.0
        %734 = vmatpush1.msra.mxu0 0.0
        %735 = vmatprep.subr.mxu0 0.0
        %736 = vmatpush1.msra.mxu0 0.0
        %737 = vmatprep.subr.mxu0 0.0
        %738 = vmatpush1.msra.mxu0 0.0
        %739 = vmatprep.subr.mxu0 0.0
        %740 = vmatpush1.msra.mxu0 0.0
        %741 = vmatprep.subr.mxu0 0.0
        %742 = vmatpush1.msra.mxu0 0.0
        %743 = vmatprep.subr.mxu0 0.0
        %744 = vmatpush1.msra.mxu0 0.0
        %745 = vmatprep.subr.mxu0 0.0
        %746 = vmatpush1.msra.mxu0 0.0
        %747 = vmatprep.subr.mxu0 0.0
        %748 = vmatpush1.msra.mxu0 0.0
        %749 = vmatprep.mubr.f32.mxu0 0.0
        %750 = vmatmul.mubr.f32.gmra.mrb[0].mxu0 %v683
        %v751 = vpop.f32.mrb[0].mxu0
        %v752 = vadd.f32 %v592, %v751
        %v753 = vpop.f32.mrb[0].mxu0
        %754 = vmatprep.mubr.f32.mxu0 0.0
        %755 = vmatmul.mubr.f32.gmra.mrb[0].mxu0 %v684
        %v756 = vpop.f32.mrb[0].mxu0
        %v757 = vadd.f32 %v592, %v756
        %v758 = vpop.f32.mrb[0].mxu0
        %759 = vdwg.mxu0
        %760 = vset.pattern.permute.xlu0 2
        %761 = vperm.xlu0 %760, %v418
        %v762 = vpop.permute.xlu0 %761
        %764 = vset.pattern.permute.xlu0 2
        %765 = vperm.xlu0 %764, %v419
        %v766 = vpop.permute.xlu0 %765
        %v768 = vmul.f32 %v762, %v572
        %v769 = vmul.f32 %v766, %v572
        %v770 = vadd.f32 %v540, %v768
        %v771 = vadd.f32 %v545, %v769
        %v772 = vadd.f32 %v770, %v582
        %v773 = vadd.f32 %v771, %v582
        %v774 = vmax.f32 %v772, 0.0
        %v775 = vmax.f32 %v773, 0.0
        %776 = vmatprep.subr.mxu0 0.0
        %777 = vmatpush1.msra.mxu0 %v401
        %778 = vmatprep.subr.mxu0 0.0
        %779 = vmatpush1.msra.mxu0 %v402
        %780 = vmatprep.subr.mxu0 0.0
        %781 = vmatpush1.msra.mxu0 %v403
        %782 = vmatprep.subr.mxu0 0.0
        %783 = vmatpush1.msra.mxu0 %v404
        %784 = vmatprep.subr.mxu0 0.0
        %785 = vmatpush1.msra.mxu0 %v405
        %786 = vmatprep.subr.mxu0 0.0
        %787 = vmatpush1.msra.mxu0 %v406
        %788 = vmatprep.subr.mxu0 0.0
        %789 = vmatpush1.msra.mxu0 %v407
        %790 = vmatprep.subr.mxu0 0.0
        %791 = vmatpush1.msra.mxu0 %v408
        %792 = vmatprep.subr.mxu0 0.0
        %793 = vmatpush1.msra.mxu0 %v409
        %794 = vmatprep.subr.mxu0 0.0
        %795 = vmatpush1.msra.mxu0 %v410
        %796 = vmatprep.subr.mxu0 0.0
        %797 = vmatpush1.msra.mxu0 %v411
        %798 = vmatprep.subr.mxu0 0.0
        %799 = vmatpush1.msra.mxu0 %v412
        %800 = vmatprep.subr.mxu0 0.0
        %801 = vmatpush1.msra.mxu0 %v413
        %802 = vmatprep.subr.mxu0 0.0
        %803 = vmatpush1.msra.mxu0 %v414
        %804 = vmatprep.subr.mxu0 0.0
        %805 = vmatpush1.msra.mxu0 %v415
        %806 = vmatprep.subr.mxu0 0.0
        %807 = vmatpush1.msra.mxu0 %v416
        %808 = vmatprep.subr.mxu0 0.0
        %809 = vmatpush1.msra.mxu0 0.0
        %810 = vmatprep.subr.mxu0 0.0
        %811 = vmatpush1.msra.mxu0 0.0
        %812 = vmatprep.subr.mxu0 0.0
        %813 = vmatpush1.msra.mxu0 0.0
        %814 = vmatprep.subr.mxu0 0.0
        %815 = vmatpush1.msra.mxu0 0.0
        %816 = vmatprep.subr.mxu0 0.0
        %817 = vmatpush1.msra.mxu0 0.0
        %818 = vmatprep.subr.mxu0 0.0
        %819 = vmatpush1.msra.mxu0 0.0
        %820 = vmatprep.subr.mxu0 0.0
        %821 = vmatpush1.msra.mxu0 0.0
        %822 = vmatprep.subr.mxu0 0.0
        %823 = vmatpush1.msra.mxu0 0.0
        %824 = vmatprep.subr.mxu0 0.0
        %825 = vmatpush1.msra.mxu0 0.0
        %826 = vmatprep.subr.mxu0 0.0
        %827 = vmatpush1.msra.mxu0 0.0
        %828 = vmatprep.subr.mxu0 0.0
        %829 = vmatpush1.msra.mxu0 0.0
        %830 = vmatprep.subr.mxu0 0.0
        %831 = vmatpush1.msra.mxu0 0.0
        %832 = vmatprep.subr.mxu0 0.0
        %833 = vmatpush1.msra.mxu0 0.0
        %834 = vmatprep.subr.mxu0 0.0
        %835 = vmatpush1.msra.mxu0 0.0
        %836 = vmatprep.subr.mxu0 0.0
        %837 = vmatpush1.msra.mxu0 0.0
        %838 = vmatprep.subr.mxu0 0.0
        %839 = vmatpush1.msra.mxu0 0.0
        %840 = vmatprep.mubr.f32.mxu0 0.0
        %841 = vmatmul.mubr.f32.gmra.mrb[0].mxu0 %v774
        %v842 = vpop.f32.mrb[0].mxu0
        %v843 = vadd.f32 %v592, %v842
        %v844 = vpop.f32.mrb[0].mxu0
        %845 = vmatprep.mubr.f32.mxu0 0.0
        %846 = vmatmul.mubr.f32.gmra.mrb[0].mxu0 %v775
        %v847 = vpop.f32.mrb[0].mxu0
        %v848 = vadd.f32 %v592, %v847
        %v849 = vpop.f32.mrb[0].mxu0
        %850 = vdwg.mxu0
        %851 = vset.pattern.permute.xlu0 3
        %852 = vperm.xlu0 %851, %v418
        %v853 = vpop.permute.xlu0 %852
        %855 = vset.pattern.permute.xlu0 3
        %856 = vperm.xlu0 %855, %v419
        %v857 = vpop.permute.xlu0 %856
        %v859 = vmul.f32 %v853, %v572
        %v860 = vmul.f32 %v857, %v572
        %v861 = vadd.f32 %v550, %v859
        %v862 = vadd.f32 %v555, %v860
        %v863 = vadd.f32 %v861, %v582
        %v864 = vadd.f32 %v862, %v582
        %v865 = vmax.f32 %v863, 0.0
        %v866 = vmax.f32 %v864, 0.0
        %867 = vmatprep.subr.mxu0 0.0
        %868 = vmatpush1.msra.mxu0 %v401
        %869 = vmatprep.subr.mxu0 0.0
        %870 = vmatpush1.msra.mxu0 %v402
        %871 = vmatprep.subr.mxu0 0.0
        %872 = vmatpush1.msra.mxu0 %v403
        %873 = vmatprep.subr.mxu0 0.0
        %874 = vmatpush1.msra.mxu0 %v404
        %875 = vmatprep.subr.mxu0 0.0
        %876 = vmatpush1.msra.mxu0 %v405
        %877 = vmatprep.subr.mxu0 0.0
        %878 = vmatpush1.msra.mxu0 %v406
        %879 = vmatprep.subr.mxu0 0.0
        %880 = vmatpush1.msra.mxu0 %v407
        %881 = vmatprep.subr.mxu0 0.0
        %882 = vmatpush1.msra.mxu0 %v408
        %883 = vmatprep.subr.mxu0 0.0
        %884 = vmatpush1.msra.mxu0 %v409
        %885 = vmatprep.subr.mxu0 0.0
        %886 = vmatpush1.msra.mxu0 %v410
        %887 = vmatprep.subr.mxu0 0.0
        %888 = vmatpush1.msra.mxu0 %v411
        %889 = vmatprep.subr.mxu0 0.0
        %890 = vmatpush1.msra.mxu0 %v412
        %891 = vmatprep.subr.mxu0 0.0
        %892 = vmatpush1.msra.mxu0 %v413
        %893 = vmatprep.subr.mxu0 0.0
        %894 = vmatpush1.msra.mxu0 %v414
        %895 = vmatprep.subr.mxu0 0.0
        %896 = vmatpush1.msra.mxu0 %v415
        %897 = vmatprep.subr.mxu0 0.0
        %898 = vmatpush1.msra.mxu0 %v416
        %899 = vmatprep.subr.mxu0 0.0
        %900 = vmatpush1.msra.mxu0 0.0
        %901 = vmatprep.subr.mxu0 0.0
        %902 = vmatpush1.msra.mxu0 0.0
        %903 = vmatprep.subr.mxu0 0.0
        %904 = vmatpush1.msra.mxu0 0.0
        %905 = vmatprep.subr.mxu0 0.0
        %906 = vmatpush1.msra.mxu0 0.0
        %907 = vmatprep.subr.mxu0 0.0
        %908 = vmatpush1.msra.mxu0 0.0
        %909 = vmatprep.subr.mxu0 0.0
        %910 = vmatpush1.msra.mxu0 0.0
        %911 = vmatprep.subr.mxu0 0.0
        %912 = vmatpush1.msra.mxu0 0.0
        %913 = vmatprep.subr.mxu0 0.0
        %914 = vmatpush1.msra.mxu0 0.0
        %915 = vmatprep.subr.mxu0 0.0
        %916 = vmatpush1.msra.mxu0 0.0
        %917 = vmatprep.subr.mxu0 0.0
        %918 = vmatpush1.msra.mxu0 0.0
        %919 = vmatprep.subr.mxu0 0.0
        %920 = vmatpush1.msra.mxu0 0.0
        %921 = vmatprep.subr.mxu0 0.0
        %922 = vmatpush1.msra.mxu0 0.0
        %923 = vmatprep.subr.mxu0 0.0
        %924 = vmatpush1.msra.mxu0 0.0
        %925 = vmatprep.subr.mxu0 0.0
        %926 = vmatpush1.msra.mxu0 0.0
        %927 = vmatprep.subr.mxu0 0.0
        %928 = vmatpush1.msra.mxu0 0.0
        %929 = vmatprep.subr.mxu0 0.0
        %930 = vmatpush1.msra.mxu0 0.0
        %931 = vmatprep.mubr.f32.mxu0 0.0
        %932 = vmatmul.mubr.f32.gmra.mrb[0].mxu0 %v865
        %v933 = vpop.f32.mrb[0].mxu0
        %v934 = vadd.f32 %v592, %v933
        %v935 = vpop.f32.mrb[0].mxu0
        %936 = vmatprep.mubr.f32.mxu0 0.0
        %937 = vmatmul.mubr.f32.gmra.mrb[0].mxu0 %v866
        %v938 = vpop.f32.mrb[0].mxu0
        %v939 = vadd.f32 %v592, %v938
        %v940 = vpop.f32.mrb[0].mxu0
        %941 = vdwg.mxu0
        %944 = vrot.lane.b32.xlu0 %v661, 96
        %v945 = vpop.permute.xlu0 %944
        %946 = vrot.lane.b32.xlu0 %v666, 96
        %v947 = vpop.permute.xlu0 %946
        %v950 = vmul.f32 %v418, %v945
        %v951 = vmul.f32 %v419, %v947
        %v952 = vmax.f32 %v950, 0.0
        %v953 = vmax.f32 %v951, 0.0
        %v954 = vmin.f32 %v952, 1.0
        %v955 = vmin.f32 %v953, 1.0
        %958 = vrot.lane.b32.xlu0 %v752, 97
        %v959 = vpop.permute.xlu0 %958
        %960 = vrot.lane.b32.xlu0 %v757, 97
        %v961 = vpop.permute.xlu0 %960
        %v964 = vmul.f32 %v418, %v959
        %v965 = vmul.f32 %v419, %v961
        %v966 = vmax.f32 %v964, 0.0
        %v967 = vmax.f32 %v965, 0.0
        %v968 = vmin.f32 %v966, 1.0
        %v969 = vmin.f32 %v967, 1.0
        %972 = vrot.lane.b32.xlu0 %v843, 98
        %v973 = vpop.permute.xlu0 %972
        %974 = vrot.lane.b32.xlu0 %v848, 98
        %v975 = vpop.permute.xlu0 %974
        %v978 = vmul.f32 %v418, %v973
        %v979 = vmul.f32 %v419, %v975
        %v980 = vmax.f32 %v978, 0.0
        %v981 = vmax.f32 %v979, 0.0
        %v982 = vmin.f32 %v980, 1.0
        %v983 = vmin.f32 %v981, 1.0
        %986 = vrot.lane.b32.xlu0 %v934, 99
        %v987 = vpop.permute.xlu0 %986
        %988 = vrot.lane.b32.xlu0 %v939, 99
        %v989 = vpop.permute.xlu0 %988
        %v992 = vmul.f32 %v418, %v987
        %v993 = vmul.f32 %v419, %v989
        %v994 = vmax.f32 %v992, 0.0
        %v995 = vmax.f32 %v993, 0.0
        %v996 = vmin.f32 %v994, 1.0
        %v997 = vmin.f32 %v995, 1.0
        %1000 = vrot.lane.b32.xlu0 %v968, 127
        %v1001 = vpop.permute.xlu0 %1000
        %1002 = vrot.lane.b32.xlu0 %v969, 127
        %v1003 = vpop.permute.xlu0 %1002
        %v1006 = vmax.f32 %v954, %v1001
        %v1007 = vmax.f32 %v955, %v1003
        %1010 = vrot.lane.b32.xlu0 %v982, 126
        %v1011 = vpop.permute.xlu0 %1010
        %1012 = vrot.lane.b32.xlu0 %v983, 126
        %v1013 = vpop.permute.xlu0 %1012
        %v1016 = vmax.f32 %v1006, %v1011
        %v1017 = vmax.f32 %v1007, %v1013
        %1020 = vrot.lane.b32.xlu0 %v996, 125
        %v1021 = vpop.permute.xlu0 %1020
        %1022 = vrot.lane.b32.xlu0 %v997, 125
        %v1023 = vpop.permute.xlu0 %1022
        %v1026 = vmax.f32 %v1016, %v1021
        %v1027 = vmax.f32 %v1017, %v1023
        %v1028 = vsub.f32 %v954, %v1026
        %v1029 = vsub.f32 %v955, %v1027
        %v1030 = vmul.f32 %v1028, 1.442695
        %v1031 = vpow.pop %v1030
        %v1032 = vmul.f32 %v1029, 1.442695
        %v1033 = vpow.pop %v1032
        %1036 = vrot.lane.b32.xlu0 %v1026, 1
        %v1037 = vpop.permute.xlu0 %1036
        %1038 = vrot.lane.b32.xlu0 %v1027, 1
        %v1039 = vpop.permute.xlu0 %1038
        %v1042 = vsub.f32 %v968, %v1037
        %v1043 = vsub.f32 %v969, %v1039
        %v1044 = vmul.f32 %v1042, 1.442695
        %v1045 = vpow.pop %v1044
        %v1046 = vmul.f32 %v1043, 1.442695
        %v1047 = vpow.pop %v1046
        %1048 = vrot.lane.b32.xlu0 %v1026, 2
        %v1049 = vpop.permute.xlu0 %1048
        %1050 = vrot.lane.b32.xlu0 %v1027, 2
        %v1051 = vpop.permute.xlu0 %1050
        %v1054 = vsub.f32 %v982, %v1049
        %v1055 = vsub.f32 %v983, %v1051
        %v1056 = vmul.f32 %v1054, 1.442695
        %v1057 = vpow.pop %v1056
        %v1058 = vmul.f32 %v1055, 1.442695
        %v1059 = vpow.pop %v1058
        %1060 = vrot.lane.b32.xlu0 %v1026, 3
        %v1061 = vpop.permute.xlu0 %1060
        %1062 = vrot.lane.b32.xlu0 %v1027, 3
        %v1063 = vpop.permute.xlu0 %1062
        %v1066 = vsub.f32 %v996, %v1061
        %v1067 = vsub.f32 %v997, %v1063
        %v1068 = vmul.f32 %v1066, 1.442695
        %v1069 = vpow.pop %v1068
        %v1070 = vmul.f32 %v1067, 1.442695
        %v1071 = vpow.pop %v1070
        %1074 = vrot.lane.b32.xlu0 %v1045, 127
        %v1075 = vpop.permute.xlu0 %1074
        %1076 = vrot.lane.b32.xlu0 %v1047, 127
        %v1077 = vpop.permute.xlu0 %1076
        %v1080 = vadd.f32 %v1031, %v1075
        %v1081 = vadd.f32 %v1033, %v1077
        %1084 = vrot.lane.b32.xlu0 %v1057, 126
        %v1085 = vpop.permute.xlu0 %1084
        %1086 = vrot.lane.b32.xlu0 %v1059, 126
        %v1087 = vpop.permute.xlu0 %1086
        %v1090 = vadd.f32 %v1080, %v1085
        %v1091 = vadd.f32 %v1081, %v1087
        %1094 = vrot.lane.b32.xlu0 %v1069, 125
        %v1095 = vpop.permute.xlu0 %1094
        %1096 = vrot.lane.b32.xlu0 %v1071, 125
        %v1097 = vpop.permute.xlu0 %1096
        %v1100 = vadd.f32 %v1090, %v1095
        %v1101 = vadd.f32 %v1091, %v1097
        %v1102 = vrcp.pop %v1100
        %v1103 = vmul.f32 1.0, %v1102
        %v1104 = vrcp.pop %v1101
        %v1105 = vmul.f32 1.0, %v1104
        %v1106 = vmul.f32 %v1031, %v1103
        %v1107 = vmul.f32 %v1033, %v1105
        %vm1108 = vcmask 7168
        %1109 = vst.msk [vmem:[%s393] sm:$0xff] %vm1108, %v1106
        %1110 = vst.msk [vmem:[%s393 + $0x8] sm:$0xff] %vm1108, %v1107
        %1112 = vset.pattern.permute.xlu0 0
        %1113 = vperm.xlu0 %1112, %v1106
        %v1114 = vpop.permute.xlu0 %1113
        %1117 = vset.pattern.permute.xlu0 0
        %1118 = vperm.xlu0 %1117, %v1107
        %v1119 = vpop.permute.xlu0 %1118
        %v1121 = vmul.f32 %v661, %v1114
        %v1122 = vmul.f32 %v666, %v1119
        %1125 = vrot.lane.b32.xlu0 %v1103, 1
        %v1126 = vpop.permute.xlu0 %1125
        %1127 = vrot.lane.b32.xlu0 %v1105, 1
        %v1128 = vpop.permute.xlu0 %1127
        %v1131 = vmul.f32 %v1045, %v1126
        %v1132 = vmul.f32 %v1047, %v1128
        %vm1133 = vcmask 15368
        %1134 = vst.msk [vmem:[%s393] sm:$0xff] %vm1133, %v1131
        %1135 = vst.msk [vmem:[%s393 + $0x8] sm:$0xff] %vm1133, %v1132
        %1137 = vset.pattern.permute.xlu0 1
        %1138 = vperm.xlu0 %1137, %v1131
        %v1139 = vpop.permute.xlu0 %1138
        %1142 = vset.pattern.permute.xlu0 1
        %1143 = vperm.xlu0 %1142, %v1132
        %v1144 = vpop.permute.xlu0 %1143
        %v1146 = vmul.f32 %v752, %v1139
        %v1147 = vmul.f32 %v757, %v1144
        %v1148 = vadd.f32 %v1121, %v1146
        %v1149 = vadd.f32 %v1122, %v1147
        %1150 = vrot.lane.b32.xlu0 %v1103, 2
        %v1151 = vpop.permute.xlu0 %1150
        %1152 = vrot.lane.b32.xlu0 %v1105, 2
        %v1153 = vpop.permute.xlu0 %1152
        %v1156 = vmul.f32 %v1057, %v1151
        %v1157 = vmul.f32 %v1059, %v1153
        %vm1158 = vcmask 23568
        %1159 = vst.msk [vmem:[%s393] sm:$0xff] %vm1158, %v1156
        %1160 = vst.msk [vmem:[%s393 + $0x8] sm:$0xff] %vm1158, %v1157
        %1162 = vset.pattern.permute.xlu0 2
        %1163 = vperm.xlu0 %1162, %v1156
        %v1164 = vpop.permute.xlu0 %1163
        %1167 = vset.pattern.permute.xlu0 2
        %1168 = vperm.xlu0 %1167, %v1157
        %v1169 = vpop.permute.xlu0 %1168
        %v1171 = vmul.f32 %v843, %v1164
        %v1172 = vmul.f32 %v848, %v1169
        %v1173 = vadd.f32 %v1148, %v1171
        %v1174 = vadd.f32 %v1149, %v1172
        %1175 = vrot.lane.b32.xlu0 %v1103, 3
        %v1176 = vpop.permute.xlu0 %1175
        %1177 = vrot.lane.b32.xlu0 %v1105, 3
        %v1178 = vpop.permute.xlu0 %1177
        %v1181 = vmul.f32 %v1069, %v1176
        %v1182 = vmul.f32 %v1071, %v1178
        %vm1183 = vcmask 31768
        %1184 = vst.msk [vmem:[%s393] sm:$0xff] %vm1183, %v1181
        %1185 = vst.msk [vmem:[%s393 + $0x8] sm:$0xff] %vm1183, %v1182
        %1187 = vset.pattern.permute.xlu0 3
        %1188 = vperm.xlu0 %1187, %v1181
        %v1189 = vpop.permute.xlu0 %1188
        %1192 = vset.pattern.permute.xlu0 3
        %1193 = vperm.xlu0 %1192, %v1182
        %v1194 = vpop.permute.xlu0 %1193
        %v1196 = vmul.f32 %v934, %v1189
        %v1197 = vmul.f32 %v939, %v1194
        %v1198 = vadd.f32 %v1173, %v1196
        %v1199 = vadd.f32 %v1174, %v1197
        %1200 = vst.msk [vmem:[%s352] sm:$0xff] %vm428, %v1198
        %1201 = vst.msk [vmem:[%s352 + $0x8] sm:$0xff] %vm428, %v1199
        %s1202 = sand.u32 %s206, 1
        %s1203 = scalar_lea.sflag [#allocation3], %s1202
        %s1204 = sand.u32 %s206, 1
        %s1205 = smul.addr %s1204, 16
        %s1206 = scalar_lea.vmem [#allocation2], %s1205
        %s1207 = smul.u32 2, %s28
        %p1208 = scmp.lt.s32.totalorder %s27, 1
        %s1209 = scalar_select %p1208, %s27, 1
        %p1210 = scmp.lt.s32.totalorder %s1207, 1
        %s1211 = scalar_select %p1210, %s1207, 1
        %s1212 = smul.addr %s1209, 2
        %s1213 = sadd.s32 %s1211, %s1212
        %s1214 = smul.addr %s1213, 8
        %s1215 = scalar_lea.vmem %s8, %s1214
        // Predicated region
        $region49: #{tpu_custom_call.1} parent=47 // pred_check
          %p1216 = pneg %p216
        $region50: #{tpu_custom_call.1} parent=47 // pred_check_branch
          %1218 = sbr.rel (%p1216) target = $region52
        $region51: #{tpu_custom_call.1} parent=47 // pred_region
          %s1219 = smul.u32 2, %s28
          %s1221 = ssub.s32 256, 256
          %1222 = vsyncadd %s1203, %s1221
          %s1223 = smul.addr %s27, 2
          %s1224 = sadd.s32 %s1219, %s1223
          %s1225 = smul.addr %s1224, 128
          %s1226 = scalar_lea.hbm %s7, %s1225
          %s1227 = sshll.u32 %s1206, 4
          %s1228 = int_to_ptr.vmem [resolvable:$true] %s1227
          %1233 = dma.vmem_to_hbm [thread:$0]  %s1228, 256, %s1226, %s1203, 128, 128, 8
        $region52: #{tpu_custom_call.1} parent=47 // pred_fallthru
          _
        // Predicated region
        $region53: #{tpu_custom_call.1} parent=47 // pred_check
          %p1234 = pneg %p244
        $region54: #{tpu_custom_call.1} parent=47 // pred_check_branch
          %1236 = sbr.rel (%p1234) target = $region56
        $region55: #{tpu_custom_call.1} parent=47 // pred_region
          %s1237 = smul.u32 2, %s28
        $region56: #{tpu_custom_call.1} parent=47 // pred_fallthru
          _
      $region48: #{tpu_custom_call.1} parent=5 // pred_fallthru
        _
      %p1238 = scmp.le.s32.totalorder 2, %s18
      // Predicated region
      $region57: #{tpu_custom_call.1} parent=5 // pred_check
        %p1239 = pneg %p1238
      $region58: #{tpu_custom_call.1} parent=5 // pred_check_branch
        %1241 = sbr.rel (%p1239) target = $region60
      $region59: #{tpu_custom_call.1} parent=5 // pred_region
        %s1242 = ssub.s32 %s18, 2
        // Predicated region
        $region61: #{tpu_custom_call.1} parent=59 // pred_check
          %p1243 = pneg %p222
        $region62: #{tpu_custom_call.1} parent=59 // pred_check_branch
          %1245 = sbr.rel (%p1243) target = $region64
        $region63: #{tpu_custom_call.1} parent=59 // pred_region
          %s1246 = sand.u32 %s207, 1
          %s1247 = scalar_lea.sflag [#allocation3], %s1246
          %s1248 = sand.u32 %s207, 1
          %s1249 = smul.addr %s1248, 16
          %s1250 = scalar_lea.vmem [#allocation2], %s1249
          %1251 = dma.done %s1247, 256
        $region64: #{tpu_custom_call.1} parent=59 // pred_fallthru
          _
        // Predicated region
        $region65: #{tpu_custom_call.1} parent=59 // pred_check
          %p1252 = pneg %p250
        $region66: #{tpu_custom_call.1} parent=59 // pred_check_branch
          %1254 = sbr.rel (%p1252) target = $region68
        $region67: #{tpu_custom_call.1} parent=59 // pred_region
          %s1255 = smul.u32 2, %s30
          %p1256 = scmp.lt.s32.totalorder %s29, 1
          %s1257 = scalar_select %p1256, %s29, 1
          %p1258 = scmp.lt.s32.totalorder %s1255, 1
          %s1259 = scalar_select %p1258, %s1255, 1
          %s1260 = smul.addr %s1257, 2
          %s1261 = sadd.s32 %s1259, %s1260
          %s1262 = smul.addr %s1261, 8
          %s1263 = scalar_lea.vmem %s8, %s1262
        $region68: #{tpu_custom_call.1} parent=59 // pred_fallthru
          _
      $region60: #{tpu_custom_call.1} parent=5 // pred_fallthru
        _
    $region6: #{tpu_custom_call.1} parent=1 // loop_footer
      %s22 = sadd.s32 1, %s18
    $region7: #{tpu_custom_call.1} parent=1 // loop_footer_branch
      %17 = sbr.rel target = $region3
    $region8: #{tpu_custom_call.1} parent=1 // loop_exit
      _
    %1264 = vsyncpa [#allocation3], 1
    %s1265 = scalar_lea.sflag [#allocation3], 1
    %1266 = vsyncpa %s1265, 1

</llo_original>
